<compile_context>
chip_gen: v7x
topology: tpu7x:2x2x1
jax: 0.10.0
libtpu: 0.0.40
codegen_flags: <defaults>
</compile_context>

<pallas_src>
import numpy as np
import jax
import jax.numpy as jnp
from jax import lax
from jax.experimental import pallas as pl
from jax.experimental.pallas import tpu as pltpu

# ----- model dimensions (small, consistent with the module's __init__) -----
VOCAB = 100     # config.vocab_size
H = 32          # config.hidden_size
T = 8           # sequence length
B = 2           # batch
L = 2           # config.num_labels
G = 4 * H       # per-direction gate width; PyTorch gate order (i, f, g, o)


def _gate_update(sig, th, off, c_prev):
    """LSTM cell update from full-width sigmoid(gates)/tanh(gates) tensors.

    Columns [off : off + 4H] of `sig`/`th` hold this direction's (i, f, g, o) blocks.
    """
    i = sig[:, off + 0 * H: off + 1 * H]
    f = sig[:, off + 1 * H: off + 2 * H]
    g = th[:,  off + 2 * H: off + 3 * H]
    o = sig[:, off + 3 * H: off + 4 * H]
    c = f * c_prev + i * g
    h = o * jnp.tanh(c)
    return h, c


def bilstm_kernel(x_ref,                         # (T*B, H) embedded tokens, time-major
                  w_ih0_ref, w_hh0_ref, b0_ref,  # (H,8H)  (2H,8H block-diag)  (1,8H)
                  w_ih1_ref, w_hh1_ref, b1_ref,  # (2H,8H) (H,4H fwd only)     (1,8H)
                  w_fc_ref, b_fc_ref,            # (2H,L)  (1,L)
                  prob_ref,                      # out: (B, L)
                  x1_ref):                       # scratch (T*B, 2H): layer-0 outputs
    f32 = jnp.float32

    # Hoisted weight loads (read once, reused across the unrolled recurrences).
    w_ih0 = w_ih0_ref[...]
    w_hh0 = w_hh0_ref[...]
    b0 = b0_ref[...]
    w_ih1 = w_ih1_ref[...]
    w_hh1 = w_hh1_ref[...]
    b1 = b1_ref[...]

    x = x_ref[...]                                               # (T*B, H)

    # ---------------- layer 0: one wide input projection, both directions ----------------
    xg0 = jnp.dot(x, w_ih0, preferred_element_type=f32) + b0     # (T*B, 8H)

    zeros_bh = jnp.zeros((B, H), f32)
    h_f = zeros_bh
    c_f = zeros_bh
    h_b = zeros_bh
    c_b = zeros_bh

    for t in range(T):                    # fully unrolled fused fwd+bwd recurrence
        rt = T - 1 - t
        xg = jnp.concatenate(
            [xg0[t * B:(t + 1) * B, 0:G],           # forward gates at time t
             xg0[rt * B:(rt + 1) * B, G:2 * G]],    # backward gates at time rt
            axis=1)                                  # (B, 8H)
        h_cat = jnp.concatenate([h_f, h_b], axis=1)              # (B, 2H)
        gates = xg + jnp.dot(h_cat, w_hh0, preferred_element_type=f32)  # 1 MXU op / step
        sig = jax.nn.sigmoid(gates)      # one full-width sigmoid pass
        th = jnp.tanh(gates)             # one full-width tanh pass
        h_f, c_f = _gate_update(sig, th, 0, c_f)
        h_b, c_b = _gate_update(sig, th, G, c_b)
        x1_ref[t * B:(t + 1) * B, 0:H] = h_f          # layer-1 input, fwd half (time t)
        x1_ref[rt * B:(rt + 1) * B, H:2 * H] = h_b    # layer-1 input, bwd half (time rt)

    # ---------------- layer 1: one wide input projection, both directions ----------------
    x1 = x1_ref[...]                                              # (T*B, 2H)
    xg1 = jnp.dot(x1, w_ih1, preferred_element_type=f32) + b1     # (T*B, 8H)

    # forward direction: only the final hidden state is needed
    h1 = zeros_bh
    c1 = zeros_bh
    for t in range(T):
        gates = (xg1[t * B:(t + 1) * B, 0:G]
                 + jnp.dot(h1, w_hh1, preferred_element_type=f32))
        sig = jax.nn.sigmoid(gates)
        th = jnp.tanh(gates)
        h1, c1 = _gate_update(sig, th, 0, c1)

    # backward direction: lstm_out[:, -1, :] for the reverse direction is its FIRST
    # step from a zero initial state, so no W_hh term is needed.  (Valid only for
    # full, unpadded sequences of length T.)
    gates_b = xg1[(T - 1) * B:T * B, G:2 * G]
    sig_b = jax.nn.sigmoid(gates_b)
    th_b = jnp.tanh(gates_b)
    h1b, _ = _gate_update(sig_b, th_b, 0, zeros_bh)

    # ---------------- fc + softmax ----------------
    h_last = jnp.concatenate([h1, h1b], axis=1)                   # (B, 2H)
    logits = (jnp.dot(h_last, w_fc_ref[...], preferred_element_type=f32)
              + b_fc_ref[...])
    logits = logits - jnp.max(logits, axis=1, keepdims=True)
    e = jnp.exp(logits)
    prob_ref[...] = e / jnp.sum(e, axis=1, keepdims=True)


# ------------------------- parameter init (deterministic) -------------------------
def init_params(key):
    keys = iter(jax.random.split(key, 32))
    s = float(1.0 / np.sqrt(H))

    def u(shape):
        return jax.random.uniform(next(keys), shape, jnp.float32, -s, s)

    raw = {"embedding": jax.random.normal(next(keys), (VOCAB, H), jnp.float32)}
    for layer, in_dim in ((0, H), (1, 2 * H)):
        for suffix in ("", "_reverse"):
            name = f"l{layer}{suffix}"
            raw[f"w_ih_{name}"] = u((4 * H, in_dim))   # PyTorch layout (4H, in)
            raw[f"w_hh_{name}"] = u((4 * H, H))
            raw[f"b_ih_{name}"] = u((4 * H,))
            raw[f"b_hh_{name}"] = u((4 * H,))
    raw["w_fc"] = u((L, 2 * H))
    raw["b_fc"] = u((L,))
    return raw


# ------------------------- host-side weight packing (done ONCE, outside jit) -------------------------
def pack_weights(raw):
    def tr(w):
        return jnp.transpose(w)     # PyTorch (out, in) -> (in, out)

    # layer 0: both directions concatenated along the gate (lane) axis
    w_ih0 = jnp.concatenate([tr(raw["w_ih_l0"]), tr(raw["w_ih_l0_reverse"])], axis=1)   # (H, 8H)
    w_hh0 = jnp.zeros((2 * H, 2 * G), jnp.float32)                                      # block-diag
    w_hh0 = w_hh0.at[0:H, 0:G].set(tr(raw["w_hh_l0"]))
    w_hh0 = w_hh0.at[H:2 * H, G:2 * G].set(tr(raw["w_hh_l0_reverse"]))
    b0 = jnp.concatenate([raw["b_ih_l0"] + raw["b_hh_l0"],
                          raw["b_ih_l0_reverse"] + raw["b_hh_l0_reverse"]]).reshape(1, 2 * G)

    # layer 1 (reverse-direction W_hh is never needed for lstm_out[:, -1, :])
    w_ih1 = jnp.concatenate([tr(raw["w_ih_l1"]), tr(raw["w_ih_l1_reverse"])], axis=1)   # (2H, 8H)
    w_hh1 = tr(raw["w_hh_l1"])                                                          # (H, 4H)
    b1 = jnp.concatenate([raw["b_ih_l1"] + raw["b_hh_l1"],
                          raw["b_ih_l1_reverse"] + raw["b_hh_l1_reverse"]]).reshape(1, 2 * G)

    w_fc = tr(raw["w_fc"])              # (2H, L)
    b_fc = raw["b_fc"].reshape(1, L)
    return (w_ih0, w_hh0, b0, w_ih1, w_hh1, b1, w_fc, b_fc)


# ------------------------- jitted wrapper -------------------------
@jax.jit
def bilstm_forward(input_ids, embedding, packed):
    ids_tm = jnp.transpose(input_ids).reshape(-1)                        # (T*B,), time-major
    x = jnp.take(embedding, ids_tm, axis=0).astype(jnp.float32)          # (T*B, H)
    args = (x,) + tuple(packed)

    return pl.pallas_call(
        bilstm_kernel,
        out_shape=jax.ShapeDtypeStruct((B, L), jnp.float32),
        in_specs=[pl.BlockSpec(memory_space=pltpu.MemorySpace.VMEM) for _ in args],
        out_specs=pl.BlockSpec(memory_space=pltpu.MemorySpace.VMEM),
        scratch_shapes=[pltpu.VMEM((T * B, 2 * H), jnp.float32)],        # layer-0 outputs
    )(*args)


# ------------------------- pure-JAX reference (PyTorch LSTM semantics) -------------------------
def _gates_to_hc_ref(gates, c_prev):
    i = jax.nn.sigmoid(gates[:, 0 * H:1 * H])
    f = jax.nn.sigmoid(gates[:, 1 * H:2 * H])
    g = jnp.tanh(gates[:, 2 * H:3 * H])
    o = jax.nn.sigmoid(gates[:, 3 * H:4 * H])
    c = f * c_prev + i * g
    h = o * jnp.tanh(c)
    return h, c


def _lstm_dir_ref(x, w_ih, w_hh, b_ih, b_hh, reverse):
    def cell(carry, x_t):
        h, c = carry
        gates = x_t @ w_ih.T + h @ w_hh.T + b_ih + b_hh
        h, c = _gates_to_hc_ref(gates, c)
        return (h, c), h

    xs = jnp.transpose(x, (1, 0, 2))
    if reverse:
        xs = xs[::-1]
    init = (jnp.zeros((x.shape[0], H), jnp.float32), jnp.zeros((x.shape[0], H), jnp.float32))
    _, hs = lax.scan(cell, init, xs)
    if reverse:
        hs = hs[::-1]
    return jnp.transpose(hs, (1, 0, 2))


def reference_forward(input_ids, raw):
    x = jnp.take(raw["embedding"], input_ids, axis=0)
    for layer in (0, 1):
        f = _lstm_dir_ref(x, raw[f"w_ih_l{layer}"], raw[f"w_hh_l{layer}"],
                          raw[f"b_ih_l{layer}"], raw[f"b_hh_l{layer}"], reverse=False)
        b = _lstm_dir_ref(x, raw[f"w_ih_l{layer}_reverse"], raw[f"w_hh_l{layer}_reverse"],
                          raw[f"b_ih_l{layer}_reverse"], raw[f"b_hh_l{layer}_reverse"], reverse=True)
        x = jnp.concatenate([f, b], axis=-1)
    logits = x[:, -1, :] @ raw["w_fc"].T + raw["b_fc"]
    return jax.nn.softmax(logits, axis=1)


if __name__ == "__main__":
    key = jax.random.PRNGKey(0)
    k_param, k_ids = jax.random.split(key)
    raw = init_params(k_param)
    packed = pack_weights(raw)                       # host-side, once
    input_ids = jax.random.randint(k_ids, (B, T), 0, VOCAB)

    prob = jax.block_until_ready(bilstm_forward(input_ids, raw["embedding"], packed))
    ref = jax.block_until_ready(reference_forward(input_ids, raw))

    assert prob.shape == (B, L)
    np.testing.assert_allclose(np.asarray(prob), np.asarray(ref), rtol=1e-3, atol=1e-3)
    print("KERNEL_OK")
</pallas_src>

<mosaic_0001>
module attributes {stable_mosaic.version = 11 : i64} {
  func.func @bilstm_kernel(%arg0: memref<16x32xf32, #tpu.memory_space<vmem>>, %arg1: memref<32x256xf32, #tpu.memory_space<vmem>>, %arg2: memref<64x256xf32, #tpu.memory_space<vmem>>, %arg3: memref<1x256xf32, #tpu.memory_space<vmem>>, %arg4: memref<64x256xf32, #tpu.memory_space<vmem>>, %arg5: memref<32x128xf32, #tpu.memory_space<vmem>>, %arg6: memref<1x256xf32, #tpu.memory_space<vmem>>, %arg7: memref<64x2xf32, #tpu.memory_space<vmem>>, %arg8: memref<1x2xf32, #tpu.memory_space<vmem>>, %arg9: memref<2x2xf32, #tpu.memory_space<vmem>>, %arg10: memref<16x64xf32, #tpu.memory_space<vmem>>) attributes {dimension_semantics = [], scalar_prefetch = 0 : i64, scratch_operands = 1 : i64, tpu.core_type = #tpu.core_type<tc>} {
    %c0 = arith.constant 0 : index
    %c0_0 = arith.constant 0 : index
    %0 = vector.load %arg1[%c0, %c0_0] : memref<32x256xf32, #tpu.memory_space<vmem>>, vector<32x256xf32>
    %c0_1 = arith.constant 0 : index
    %c0_2 = arith.constant 0 : index
    %1 = vector.load %arg2[%c0_1, %c0_2] : memref<64x256xf32, #tpu.memory_space<vmem>>, vector<64x256xf32>
    %c0_3 = arith.constant 0 : index
    %c0_4 = arith.constant 0 : index
    %2 = vector.load %arg3[%c0_3, %c0_4] : memref<1x256xf32, #tpu.memory_space<vmem>>, vector<1x256xf32>
    %c0_5 = arith.constant 0 : index
    %c0_6 = arith.constant 0 : index
    %3 = vector.load %arg4[%c0_5, %c0_6] : memref<64x256xf32, #tpu.memory_space<vmem>>, vector<64x256xf32>
    %c0_7 = arith.constant 0 : index
    %c0_8 = arith.constant 0 : index
    %4 = vector.load %arg5[%c0_7, %c0_8] : memref<32x128xf32, #tpu.memory_space<vmem>>, vector<32x128xf32>
    %c0_9 = arith.constant 0 : index
    %c0_10 = arith.constant 0 : index
    %5 = vector.load %arg6[%c0_9, %c0_10] : memref<1x256xf32, #tpu.memory_space<vmem>>, vector<1x256xf32>
    %c0_11 = arith.constant 0 : index
    %c0_12 = arith.constant 0 : index
    %6 = vector.load %arg0[%c0_11, %c0_12] : memref<16x32xf32, #tpu.memory_space<vmem>>, vector<16x32xf32>
    %cst = arith.constant dense<0.000000e+00> : vector<16x256xf32>
    %7 = tpu.matmul %6, %0, %cst {dimension_numbers = #tpu.dot_dimension_numbers<[1], [0], [0], [1], [0, 0, 1, 1], [], []>} : vector<16x32xf32>, vector<32x256xf32>, vector<16x256xf32> -> vector<16x256xf32>
    %8 = vector.broadcast %2 : vector<1x256xf32> to vector<16x256xf32>
    %9 = arith.addf %7, %8 : vector<16x256xf32>
    %cst_13 = arith.constant 0.000000e+00 : f32
    %10 = vector.broadcast %cst_13 : f32 to vector<2x32xf32>
    %11 = vector.extract_strided_slice %9 {offsets = [0, 0], sizes = [2, 128], strides = [1, 1]} : vector<16x256xf32> to vector<2x128xf32>
    %12 = vector.extract_strided_slice %9 {offsets = [14, 128], sizes = [2, 128], strides = [1, 1]} : vector<16x256xf32> to vector<2x128xf32>
    %13 = tpu.concatenate %11, %12 in 1 : vector<2x128xf32>, vector<2x128xf32> -> vector<2x256xf32>
    %14 = tpu.concatenate %10, %10 in 1 : vector<2x32xf32>, vector<2x32xf32> -> vector<2x64xf32>
    %cst_14 = arith.constant dense<0.000000e+00> : vector<2x256xf32>
    %15 = tpu.matmul %14, %1, %cst_14 {dimension_numbers = #tpu.dot_dimension_numbers<[1], [0], [0], [1], [0, 0, 1, 1], [], []>} : vector<2x64xf32>, vector<64x256xf32>, vector<2x256xf32> -> vector<2x256xf32>
    %16 = arith.addf %13, %15 : vector<2x256xf32>
    %17 = arith.negf %16 : vector<2x256xf32>
    %18 = math.exp %17 : vector<2x256xf32>
    %cst_15 = arith.constant 1.000000e+00 : f32
    %19 = vector.broadcast %cst_15 : f32 to vector<2x256xf32>
    %20 = arith.addf %19, %18 : vector<2x256xf32>
    %21 = arith.divf %19, %20 : vector<2x256xf32>
    %22 = math.tanh %16 : vector<2x256xf32>
    %23 = vector.extract_strided_slice %21 {offsets = [0, 0], sizes = [2, 32], strides = [1, 1]} : vector<2x256xf32> to vector<2x32xf32>
    %24 = vector.extract_strided_slice %21 {offsets = [0, 32], sizes = [2, 32], strides = [1, 1]} : vector<2x256xf32> to vector<2x32xf32>
    %25 = vector.extract_strided_slice %22 {offsets = [0, 64], sizes = [2, 32], strides = [1, 1]} : vector<2x256xf32> to vector<2x32xf32>
    %26 = vector.extract_strided_slice %21 {offsets = [0, 96], sizes = [2, 32], strides = [1, 1]} : vector<2x256xf32> to vector<2x32xf32>
    %27 = arith.mulf %24, %10 : vector<2x32xf32>
    %28 = arith.mulf %23, %25 : vector<2x32xf32>
    %29 = arith.addf %27, %28 : vector<2x32xf32>
    %30 = math.tanh %29 : vector<2x32xf32>
    %31 = arith.mulf %26, %30 : vector<2x32xf32>
    %32 = vector.extract_strided_slice %21 {offsets = [0, 128], sizes = [2, 32], strides = [1, 1]} : vector<2x256xf32> to vector<2x32xf32>
    %33 = vector.extract_strided_slice %21 {offsets = [0, 160], sizes = [2, 32], strides = [1, 1]} : vector<2x256xf32> to vector<2x32xf32>
    %34 = vector.extract_strided_slice %22 {offsets = [0, 192], sizes = [2, 32], strides = [1, 1]} : vector<2x256xf32> to vector<2x32xf32>
    %35 = vector.extract_strided_slice %21 {offsets = [0, 224], sizes = [2, 32], strides = [1, 1]} : vector<2x256xf32> to vector<2x32xf32>
    %36 = arith.mulf %33, %10 : vector<2x32xf32>
    %37 = arith.mulf %32, %34 : vector<2x32xf32>
    %38 = arith.addf %36, %37 : vector<2x32xf32>
    %39 = math.tanh %38 : vector<2x32xf32>
    %40 = arith.mulf %35, %39 : vector<2x32xf32>
    %c0_16 = arith.constant 0 : index
    %c0_17 = arith.constant 0 : index
    %41 = vector.load %arg10[%c0_16, %c0_17] : memref<16x64xf32, #tpu.memory_space<vmem>>, vector<2x32xf32>
    tpu.vector_store %arg10[%c0_16, %c0_17], %31 {strides = array<i32>} : memref<16x64xf32, #tpu.memory_space<vmem>>, vector<2x32xf32>,
    %c14 = arith.constant 14 : index
    %c32 = arith.constant 32 : index
    %42 = vector.load %arg10[%c14, %c32] : memref<16x64xf32, #tpu.memory_space<vmem>>, vector<2x32xf32>
    tpu.vector_store %arg10[%c14, %c32], %40 {strides = array<i32>} : memref<16x64xf32, #tpu.memory_space<vmem>>, vector<2x32xf32>,
    %43 = vector.extract_strided_slice %9 {offsets = [2, 0], sizes = [2, 128], strides = [1, 1]} : vector<16x256xf32> to vector<2x128xf32>
    %44 = vector.extract_strided_slice %9 {offsets = [12, 128], sizes = [2, 128], strides = [1, 1]} : vector<16x256xf32> to vector<2x128xf32>
    %45 = tpu.concatenate %43, %44 in 1 : vector<2x128xf32>, vector<2x128xf32> -> vector<2x256xf32>
    %46 = tpu.concatenate %31, %40 in 1 : vector<2x32xf32>, vector<2x32xf32> -> vector<2x64xf32>
    %cst_18 = arith.constant dense<0.000000e+00> : vector<2x256xf32>
    %47 = tpu.matmul %46, %1, %cst_18 {dimension_numbers = #tpu.dot_dimension_numbers<[1], [0], [0], [1], [0, 0, 1, 1], [], []>} : vector<2x64xf32>, vector<64x256xf32>, vector<2x256xf32> -> vector<2x256xf32>
    %48 = arith.addf %45, %47 : vector<2x256xf32>
    %49 = arith.negf %48 : vector<2x256xf32>
    %50 = math.exp %49 : vector<2x256xf32>
    %cst_19 = arith.constant 1.000000e+00 : f32
    %51 = vector.broadcast %cst_19 : f32 to vector<2x256xf32>
    %52 = arith.addf %51, %50 : vector<2x256xf32>
    %53 = arith.divf %51, %52 : vector<2x256xf32>
    %54 = math.tanh %48 : vector<2x256xf32>
    %55 = vector.extract_strided_slice %53 {offsets = [0, 0], sizes = [2, 32], strides = [1, 1]} : vector<2x256xf32> to vector<2x32xf32>
    %56 = vector.extract_strided_slice %53 {offsets = [0, 32], sizes = [2, 32], strides = [1, 1]} : vector<2x256xf32> to vector<2x32xf32>
    %57 = vector.extract_strided_slice %54 {offsets = [0, 64], sizes = [2, 32], strides = [1, 1]} : vector<2x256xf32> to vector<2x32xf32>
    %58 = vector.extract_strided_slice %53 {offsets = [0, 96], sizes = [2, 32], strides = [1, 1]} : vector<2x256xf32> to vector<2x32xf32>
    %59 = arith.mulf %56, %29 : vector<2x32xf32>
    %60 = arith.mulf %55, %57 : vector<2x32xf32>
    %61 = arith.addf %59, %60 : vector<2x32xf32>
    %62 = math.tanh %61 : vector<2x32xf32>
    %63 = arith.mulf %58, %62 : vector<2x32xf32>
    %64 = vector.extract_strided_slice %53 {offsets = [0, 128], sizes = [2, 32], strides = [1, 1]} : vector<2x256xf32> to vector<2x32xf32>
    %65 = vector.extract_strided_slice %53 {offsets = [0, 160], sizes = [2, 32], strides = [1, 1]} : vector<2x256xf32> to vector<2x32xf32>
    %66 = vector.extract_strided_slice %54 {offsets = [0, 192], sizes = [2, 32], strides = [1, 1]} : vector<2x256xf32> to vector<2x32xf32>
    %67 = vector.extract_strided_slice %53 {offsets = [0, 224], sizes = [2, 32], strides = [1, 1]} : vector<2x256xf32> to vector<2x32xf32>
    %68 = arith.mulf %65, %38 : vector<2x32xf32>
    %69 = arith.mulf %64, %66 : vector<2x32xf32>
    %70 = arith.addf %68, %69 : vector<2x32xf32>
    %71 = math.tanh %70 : vector<2x32xf32>
    %72 = arith.mulf %67, %71 : vector<2x32xf32>
    %c2 = arith.constant 2 : index
    %c0_20 = arith.constant 0 : index
    %73 = vector.load %arg10[%c2, %c0_20] : memref<16x64xf32, #tpu.memory_space<vmem>>, vector<2x32xf32>
    tpu.vector_store %arg10[%c2, %c0_20], %63 {strides = array<i32>} : memref<16x64xf32, #tpu.memory_space<vmem>>, vector<2x32xf32>,
    %c12 = arith.constant 12 : index
    %c32_21 = arith.constant 32 : index
    %74 = vector.load %arg10[%c12, %c32_21] : memref<16x64xf32, #tpu.memory_space<vmem>>, vector<2x32xf32>
    tpu.vector_store %arg10[%c12, %c32_21], %72 {strides = array<i32>} : memref<16x64xf32, #tpu.memory_space<vmem>>, vector<2x32xf32>,
    %75 = vector.extract_strided_slice %9 {offsets = [4, 0], sizes = [2, 128], strides = [1, 1]} : vector<16x256xf32> to vector<2x128xf32>
    %76 = vector.extract_strided_slice %9 {offsets = [10, 128], sizes = [2, 128], strides = [1, 1]} : vector<16x256xf32> to vector<2x128xf32>
    %77 = tpu.concatenate %75, %76 in 1 : vector<2x128xf32>, vector<2x128xf32> -> vector<2x256xf32>
    %78 = tpu.concatenate %63, %72 in 1 : vector<2x32xf32>, vector<2x32xf32> -> vector<2x64xf32>
    %cst_22 = arith.constant dense<0.000000e+00> : vector<2x256xf32>
    %79 = tpu.matmul %78, %1, %cst_22 {dimension_numbers = #tpu.dot_dimension_numbers<[1], [0], [0], [1], [0, 0, 1, 1], [], []>} : vector<2x64xf32>, vector<64x256xf32>, vector<2x256xf32> -> vector<2x256xf32>
    %80 = arith.addf %77, %79 : vector<2x256xf32>
    %81 = arith.negf %80 : vector<2x256xf32>
    %82 = math.exp %81 : vector<2x256xf32>
    %cst_23 = arith.constant 1.000000e+00 : f32
    %83 = vector.broadcast %cst_23 : f32 to vector<2x256xf32>
    %84 = arith.addf %83, %82 : vector<2x256xf32>
    %85 = arith.divf %83, %84 : vector<2x256xf32>
    %86 = math.tanh %80 : vector<2x256xf32>
    %87 = vector.extract_strided_slice %85 {offsets = [0, 0], sizes = [2, 32], strides = [1, 1]} : vector<2x256xf32> to vector<2x32xf32>
    %88 = vector.extract_strided_slice %85 {offsets = [0, 32], sizes = [2, 32], strides = [1, 1]} : vector<2x256xf32> to vector<2x32xf32>
    %89 = vector.extract_strided_slice %86 {offsets = [0, 64], sizes = [2, 32], strides = [1, 1]} : vector<2x256xf32> to vector<2x32xf32>
    %90 = vector.extract_strided_slice %85 {offsets = [0, 96], sizes = [2, 32], strides = [1, 1]} : vector<2x256xf32> to vector<2x32xf32>
    %91 = arith.mulf %88, %61 : vector<2x32xf32>
    %92 = arith.mulf %87, %89 : vector<2x32xf32>
    %93 = arith.addf %91, %92 : vector<2x32xf32>
    %94 = math.tanh %93 : vector<2x32xf32>
    %95 = arith.mulf %90, %94 : vector<2x32xf32>
    %96 = vector.extract_strided_slice %85 {offsets = [0, 128], sizes = [2, 32], strides = [1, 1]} : vector<2x256xf32> to vector<2x32xf32>
    %97 = vector.extract_strided_slice %85 {offsets = [0, 160], sizes = [2, 32], strides = [1, 1]} : vector<2x256xf32> to vector<2x32xf32>
    %98 = vector.extract_strided_slice %86 {offsets = [0, 192], sizes = [2, 32], strides = [1, 1]} : vector<2x256xf32> to vector<2x32xf32>
    %99 = vector.extract_strided_slice %85 {offsets = [0, 224], sizes = [2, 32], strides = [1, 1]} : vector<2x256xf32> to vector<2x32xf32>
    %100 = arith.mulf %97, %70 : vector<2x32xf32>
    %101 = arith.mulf %96, %98 : vector<2x32xf32>
    %102 = arith.addf %100, %101 : vector<2x32xf32>
    %103 = math.tanh %102 : vector<2x32xf32>
    %104 = arith.mulf %99, %103 : vector<2x32xf32>
    %c4 = arith.constant 4 : index
    %c0_24 = arith.constant 0 : index
    %105 = vector.load %arg10[%c4, %c0_24] : memref<16x64xf32, #tpu.memory_space<vmem>>, vector<2x32xf32>
    tpu.vector_store %arg10[%c4, %c0_24], %95 {strides = array<i32>} : memref<16x64xf32, #tpu.memory_space<vmem>>, vector<2x32xf32>,
    %c10 = arith.constant 10 : index
    %c32_25 = arith.constant 32 : index
    %106 = vector.load %arg10[%c10, %c32_25] : memref<16x64xf32, #tpu.memory_space<vmem>>, vector<2x32xf32>
    tpu.vector_store %arg10[%c10, %c32_25], %104 {strides = array<i32>} : memref<16x64xf32, #tpu.memory_space<vmem>>, vector<2x32xf32>,
    %107 = vector.extract_strided_slice %9 {offsets = [6, 0], sizes = [2, 128], strides = [1, 1]} : vector<16x256xf32> to vector<2x128xf32>
    %108 = vector.extract_strided_slice %9 {offsets = [8, 128], sizes = [2, 128], strides = [1, 1]} : vector<16x256xf32> to vector<2x128xf32>
    %109 = tpu.concatenate %107, %108 in 1 : vector<2x128xf32>, vector<2x128xf32> -> vector<2x256xf32>
    %110 = tpu.concatenate %95, %104 in 1 : vector<2x32xf32>, vector<2x32xf32> -> vector<2x64xf32>
    %cst_26 = arith.constant dense<0.000000e+00> : vector<2x256xf32>
    %111 = tpu.matmul %110, %1, %cst_26 {dimension_numbers = #tpu.dot_dimension_numbers<[1], [0], [0], [1], [0, 0, 1, 1], [], []>} : vector<2x64xf32>, vector<64x256xf32>, vector<2x256xf32> -> vector<2x256xf32>
    %112 = arith.addf %109, %111 : vector<2x256xf32>
    %113 = arith.negf %112 : vector<2x256xf32>
    %114 = math.exp %113 : vector<2x256xf32>
    %cst_27 = arith.constant 1.000000e+00 : f32
    %115 = vector.broadcast %cst_27 : f32 to vector<2x256xf32>
    %116 = arith.addf %115, %114 : vector<2x256xf32>
    %117 = arith.divf %115, %116 : vector<2x256xf32>
    %118 = math.tanh %112 : vector<2x256xf32>
    %119 = vector.extract_strided_slice %117 {offsets = [0, 0], sizes = [2, 32], strides = [1, 1]} : vector<2x256xf32> to vector<2x32xf32>
    %120 = vector.extract_strided_slice %117 {offsets = [0, 32], sizes = [2, 32], strides = [1, 1]} : vector<2x256xf32> to vector<2x32xf32>
    %121 = vector.extract_strided_slice %118 {offsets = [0, 64], sizes = [2, 32], strides = [1, 1]} : vector<2x256xf32> to vector<2x32xf32>
    %122 = vector.extract_strided_slice %117 {offsets = [0, 96], sizes = [2, 32], strides = [1, 1]} : vector<2x256xf32> to vector<2x32xf32>
    %123 = arith.mulf %120, %93 : vector<2x32xf32>
    %124 = arith.mulf %119, %121 : vector<2x32xf32>
    %125 = arith.addf %123, %124 : vector<2x32xf32>
    %126 = math.tanh %125 : vector<2x32xf32>
    %127 = arith.mulf %122, %126 : vector<2x32xf32>
    %128 = vector.extract_strided_slice %117 {offsets = [0, 128], sizes = [2, 32], strides = [1, 1]} : vector<2x256xf32> to vector<2x32xf32>
    %129 = vector.extract_strided_slice %117 {offsets = [0, 160], sizes = [2, 32], strides = [1, 1]} : vector<2x256xf32> to vector<2x32xf32>
    %130 = vector.extract_strided_slice %118 {offsets = [0, 192], sizes = [2, 32], strides = [1, 1]} : vector<2x256xf32> to vector<2x32xf32>
    %131 = vector.extract_strided_slice %117 {offsets = [0, 224], sizes = [2, 32], strides = [1, 1]} : vector<2x256xf32> to vector<2x32xf32>
    %132 = arith.mulf %129, %102 : vector<2x32xf32>
    %133 = arith.mulf %128, %130 : vector<2x32xf32>
    %134 = arith.addf %132, %133 : vector<2x32xf32>
    %135 = math.tanh %134 : vector<2x32xf32>
    %136 = arith.mulf %131, %135 : vector<2x32xf32>
    %c6 = arith.constant 6 : index
    %c0_28 = arith.constant 0 : index
    %137 = vector.load %arg10[%c6, %c0_28] : memref<16x64xf32, #tpu.memory_space<vmem>>, vector<2x32xf32>
    tpu.vector_store %arg10[%c6, %c0_28], %127 {strides = array<i32>} : memref<16x64xf32, #tpu.memory_space<vmem>>, vector<2x32xf32>,
    %c8 = arith.constant 8 : index
    %c32_29 = arith.constant 32 : index
    %138 = vector.load %arg10[%c8, %c32_29] : memref<16x64xf32, #tpu.memory_space<vmem>>, vector<2x32xf32>
    tpu.vector_store %arg10[%c8, %c32_29], %136 {strides = array<i32>} : memref<16x64xf32, #tpu.memory_space<vmem>>, vector<2x32xf32>,
    %139 = vector.extract_strided_slice %9 {offsets = [8, 0], sizes = [2, 128], strides = [1, 1]} : vector<16x256xf32> to vector<2x128xf32>
    %140 = vector.extract_strided_slice %9 {offsets = [6, 128], sizes = [2, 128], strides = [1, 1]} : vector<16x256xf32> to vector<2x128xf32>
    %141 = tpu.concatenate %139, %140 in 1 : vector<2x128xf32>, vector<2x128xf32> -> vector<2x256xf32>
    %142 = tpu.concatenate %127, %136 in 1 : vector<2x32xf32>, vector<2x32xf32> -> vector<2x64xf32>
    %cst_30 = arith.constant dense<0.000000e+00> : vector<2x256xf32>
    %143 = tpu.matmul %142, %1, %cst_30 {dimension_numbers = #tpu.dot_dimension_numbers<[1], [0], [0], [1], [0, 0, 1, 1], [], []>} : vector<2x64xf32>, vector<64x256xf32>, vector<2x256xf32> -> vector<2x256xf32>
    %144 = arith.addf %141, %143 : vector<2x256xf32>
    %145 = arith.negf %144 : vector<2x256xf32>
    %146 = math.exp %145 : vector<2x256xf32>
    %cst_31 = arith.constant 1.000000e+00 : f32
    %147 = vector.broadcast %cst_31 : f32 to vector<2x256xf32>
    %148 = arith.addf %147, %146 : vector<2x256xf32>
    %149 = arith.divf %147, %148 : vector<2x256xf32>
    %150 = math.tanh %144 : vector<2x256xf32>
    %151 = vector.extract_strided_slice %149 {offsets = [0, 0], sizes = [2, 32], strides = [1, 1]} : vector<2x256xf32> to vector<2x32xf32>
    %152 = vector.extract_strided_slice %149 {offsets = [0, 32], sizes = [2, 32], strides = [1, 1]} : vector<2x256xf32> to vector<2x32xf32>
    %153 = vector.extract_strided_slice %150 {offsets = [0, 64], sizes = [2, 32], strides = [1, 1]} : vector<2x256xf32> to vector<2x32xf32>
    %154 = vector.extract_strided_slice %149 {offsets = [0, 96], sizes = [2, 32], strides = [1, 1]} : vector<2x256xf32> to vector<2x32xf32>
    %155 = arith.mulf %152, %125 : vector<2x32xf32>
    %156 = arith.mulf %151, %153 : vector<2x32xf32>
    %157 = arith.addf %155, %156 : vector<2x32xf32>
    %158 = math.tanh %157 : vector<2x32xf32>
    %159 = arith.mulf %154, %158 : vector<2x32xf32>
    %160 = vector.extract_strided_slice %149 {offsets = [0, 128], sizes = [2, 32], strides = [1, 1]} : vector<2x256xf32> to vector<2x32xf32>
    %161 = vector.extract_strided_slice %149 {offsets = [0, 160], sizes = [2, 32], strides = [1, 1]} : vector<2x256xf32> to vector<2x32xf32>
    %162 = vector.extract_strided_slice %150 {offsets = [0, 192], sizes = [2, 32], strides = [1, 1]} : vector<2x256xf32> to vector<2x32xf32>
    %163 = vector.extract_strided_slice %149 {offsets = [0, 224], sizes = [2, 32], strides = [1, 1]} : vector<2x256xf32> to vector<2x32xf32>
    %164 = arith.mulf %161, %134 : vector<2x32xf32>
    %165 = arith.mulf %160, %162 : vector<2x32xf32>
    %166 = arith.addf %164, %165 : vector<2x32xf32>
    %167 = math.tanh %166 : vector<2x32xf32>
    %168 = arith.mulf %163, %167 : vector<2x32xf32>
    %c8_32 = arith.constant 8 : index
    %c0_33 = arith.constant 0 : index
    %169 = vector.load %arg10[%c8_32, %c0_33] : memref<16x64xf32, #tpu.memory_space<vmem>>, vector<2x32xf32>
    tpu.vector_store %arg10[%c8_32, %c0_33], %159 {strides = array<i32>} : memref<16x64xf32, #tpu.memory_space<vmem>>, vector<2x32xf32>,
    %c6_34 = arith.constant 6 : index
    %c32_35 = arith.constant 32 : index
    %170 = vector.load %arg10[%c6_34, %c32_35] : memref<16x64xf32, #tpu.memory_space<vmem>>, vector<2x32xf32>
    tpu.vector_store %arg10[%c6_34, %c32_35], %168 {strides = array<i32>} : memref<16x64xf32, #tpu.memory_space<vmem>>, vector<2x32xf32>,
    %171 = vector.extract_strided_slice %9 {offsets = [10, 0], sizes = [2, 128], strides = [1, 1]} : vector<16x256xf32> to vector<2x128xf32>
    %172 = vector.extract_strided_slice %9 {offsets = [4, 128], sizes = [2, 128], strides = [1, 1]} : vector<16x256xf32> to vector<2x128xf32>
    %173 = tpu.concatenate %171, %172 in 1 : vector<2x128xf32>, vector<2x128xf32> -> vector<2x256xf32>
    %174 = tpu.concatenate %159, %168 in 1 : vector<2x32xf32>, vector<2x32xf32> -> vector<2x64xf32>
    %cst_36 = arith.constant dense<0.000000e+00> : vector<2x256xf32>
    %175 = tpu.matmul %174, %1, %cst_36 {dimension_numbers = #tpu.dot_dimension_numbers<[1], [0], [0], [1], [0, 0, 1, 1], [], []>} : vector<2x64xf32>, vector<64x256xf32>, vector<2x256xf32> -> vector<2x256xf32>
    %176 = arith.addf %173, %175 : vector<2x256xf32>
    %177 = arith.negf %176 : vector<2x256xf32>
    %178 = math.exp %177 : vector<2x256xf32>
    %cst_37 = arith.constant 1.000000e+00 : f32
    %179 = vector.broadcast %cst_37 : f32 to vector<2x256xf32>
    %180 = arith.addf %179, %178 : vector<2x256xf32>
    %181 = arith.divf %179, %180 : vector<2x256xf32>
    %182 = math.tanh %176 : vector<2x256xf32>
    %183 = vector.extract_strided_slice %181 {offsets = [0, 0], sizes = [2, 32], strides = [1, 1]} : vector<2x256xf32> to vector<2x32xf32>
    %184 = vector.extract_strided_slice %181 {offsets = [0, 32], sizes = [2, 32], strides = [1, 1]} : vector<2x256xf32> to vector<2x32xf32>
    %185 = vector.extract_strided_slice %182 {offsets = [0, 64], sizes = [2, 32], strides = [1, 1]} : vector<2x256xf32> to vector<2x32xf32>
    %186 = vector.extract_strided_slice %181 {offsets = [0, 96], sizes = [2, 32], strides = [1, 1]} : vector<2x256xf32> to vector<2x32xf32>
    %187 = arith.mulf %184, %157 : vector<2x32xf32>
    %188 = arith.mulf %183, %185 : vector<2x32xf32>
    %189 = arith.addf %187, %188 : vector<2x32xf32>
    %190 = math.tanh %189 : vector<2x32xf32>
    %191 = arith.mulf %186, %190 : vector<2x32xf32>
    %192 = vector.extract_strided_slice %181 {offsets = [0, 128], sizes = [2, 32], strides = [1, 1]} : vector<2x256xf32> to vector<2x32xf32>
    %193 = vector.extract_strided_slice %181 {offsets = [0, 160], sizes = [2, 32], strides = [1, 1]} : vector<2x256xf32> to vector<2x32xf32>
    %194 = vector.extract_strided_slice %182 {offsets = [0, 192], sizes = [2, 32], strides = [1, 1]} : vector<2x256xf32> to vector<2x32xf32>
    %195 = vector.extract_strided_slice %181 {offsets = [0, 224], sizes = [2, 32], strides = [1, 1]} : vector<2x256xf32> to vector<2x32xf32>
    %196 = arith.mulf %193, %166 : vector<2x32xf32>
    %197 = arith.mulf %192, %194 : vector<2x32xf32>
    %198 = arith.addf %196, %197 : vector<2x32xf32>
    %199 = math.tanh %198 : vector<2x32xf32>
    %200 = arith.mulf %195, %199 : vector<2x32xf32>
    %c10_38 = arith.constant 10 : index
    %c0_39 = arith.constant 0 : index
    %201 = vector.load %arg10[%c10_38, %c0_39] : memref<16x64xf32, #tpu.memory_space<vmem>>, vector<2x32xf32>
    tpu.vector_store %arg10[%c10_38, %c0_39], %191 {strides = array<i32>} : memref<16x64xf32, #tpu.memory_space<vmem>>, vector<2x32xf32>,
    %c4_40 = arith.constant 4 : index
    %c32_41 = arith.constant 32 : index
    %202 = vector.load %arg10[%c4_40, %c32_41] : memref<16x64xf32, #tpu.memory_space<vmem>>, vector<2x32xf32>
    tpu.vector_store %arg10[%c4_40, %c32_41], %200 {strides = array<i32>} : memref<16x64xf32, #tpu.memory_space<vmem>>, vector<2x32xf32>,
    %203 = vector.extract_strided_slice %9 {offsets = [12, 0], sizes = [2, 128], strides = [1, 1]} : vector<16x256xf32> to vector<2x128xf32>
    %204 = vector.extract_strided_slice %9 {offsets = [2, 128], sizes = [2, 128], strides = [1, 1]} : vector<16x256xf32> to vector<2x128xf32>
    %205 = tpu.concatenate %203, %204 in 1 : vector<2x128xf32>, vector<2x128xf32> -> vector<2x256xf32>
    %206 = tpu.concatenate %191, %200 in 1 : vector<2x32xf32>, vector<2x32xf32> -> vector<2x64xf32>
    %cst_42 = arith.constant dense<0.000000e+00> : vector<2x256xf32>
    %207 = tpu.matmul %206, %1, %cst_42 {dimension_numbers = #tpu.dot_dimension_numbers<[1], [0], [0], [1], [0, 0, 1, 1], [], []>} : vector<2x64xf32>, vector<64x256xf32>, vector<2x256xf32> -> vector<2x256xf32>
    %208 = arith.addf %205, %207 : vector<2x256xf32>
    %209 = arith.negf %208 : vector<2x256xf32>
    %210 = math.exp %209 : vector<2x256xf32>
    %cst_43 = arith.constant 1.000000e+00 : f32
    %211 = vector.broadcast %cst_43 : f32 to vector<2x256xf32>
    %212 = arith.addf %211, %210 : vector<2x256xf32>
    %213 = arith.divf %211, %212 : vector<2x256xf32>
    %214 = math.tanh %208 : vector<2x256xf32>
    %215 = vector.extract_strided_slice %213 {offsets = [0, 0], sizes = [2, 32], strides = [1, 1]} : vector<2x256xf32> to vector<2x32xf32>
    %216 = vector.extract_strided_slice %213 {offsets = [0, 32], sizes = [2, 32], strides = [1, 1]} : vector<2x256xf32> to vector<2x32xf32>
    %217 = vector.extract_strided_slice %214 {offsets = [0, 64], sizes = [2, 32], strides = [1, 1]} : vector<2x256xf32> to vector<2x32xf32>
    %218 = vector.extract_strided_slice %213 {offsets = [0, 96], sizes = [2, 32], strides = [1, 1]} : vector<2x256xf32> to vector<2x32xf32>
    %219 = arith.mulf %216, %189 : vector<2x32xf32>
    %220 = arith.mulf %215, %217 : vector<2x32xf32>
    %221 = arith.addf %219, %220 : vector<2x32xf32>
    %222 = math.tanh %221 : vector<2x32xf32>
    %223 = arith.mulf %218, %222 : vector<2x32xf32>
    %224 = vector.extract_strided_slice %213 {offsets = [0, 128], sizes = [2, 32], strides = [1, 1]} : vector<2x256xf32> to vector<2x32xf32>
    %225 = vector.extract_strided_slice %213 {offsets = [0, 160], sizes = [2, 32], strides = [1, 1]} : vector<2x256xf32> to vector<2x32xf32>
    %226 = vector.extract_strided_slice %214 {offsets = [0, 192], sizes = [2, 32], strides = [1, 1]} : vector<2x256xf32> to vector<2x32xf32>
    %227 = vector.extract_strided_slice %213 {offsets = [0, 224], sizes = [2, 32], strides = [1, 1]} : vector<2x256xf32> to vector<2x32xf32>
    %228 = arith.mulf %225, %198 : vector<2x32xf32>
    %229 = arith.mulf %224, %226 : vector<2x32xf32>
    %230 = arith.addf %228, %229 : vector<2x32xf32>
    %231 = math.tanh %230 : vector<2x32xf32>
    %232 = arith.mulf %227, %231 : vector<2x32xf32>
    %c12_44 = arith.constant 12 : index
    %c0_45 = arith.constant 0 : index
    %233 = vector.load %arg10[%c12_44, %c0_45] : memref<16x64xf32, #tpu.memory_space<vmem>>, vector<2x32xf32>
    tpu.vector_store %arg10[%c12_44, %c0_45], %223 {strides = array<i32>} : memref<16x64xf32, #tpu.memory_space<vmem>>, vector<2x32xf32>,
    %c2_46 = arith.constant 2 : index
    %c32_47 = arith.constant 32 : index
    %234 = vector.load %arg10[%c2_46, %c32_47] : memref<16x64xf32, #tpu.memory_space<vmem>>, vector<2x32xf32>
    tpu.vector_store %arg10[%c2_46, %c32_47], %232 {strides = array<i32>} : memref<16x64xf32, #tpu.memory_space<vmem>>, vector<2x32xf32>,
    %235 = vector.extract_strided_slice %9 {offsets = [14, 0], sizes = [2, 128], strides = [1, 1]} : vector<16x256xf32> to vector<2x128xf32>
    %236 = vector.extract_strided_slice %9 {offsets = [0, 128], sizes = [2, 128], strides = [1, 1]} : vector<16x256xf32> to vector<2x128xf32>
    %237 = tpu.concatenate %235, %236 in 1 : vector<2x128xf32>, vector<2x128xf32> -> vector<2x256xf32>
    %238 = tpu.concatenate %223, %232 in 1 : vector<2x32xf32>, vector<2x32xf32> -> vector<2x64xf32>
    %cst_48 = arith.constant dense<0.000000e+00> : vector<2x256xf32>
    %239 = tpu.matmul %238, %1, %cst_48 {dimension_numbers = #tpu.dot_dimension_numbers<[1], [0], [0], [1], [0, 0, 1, 1], [], []>} : vector<2x64xf32>, vector<64x256xf32>, vector<2x256xf32> -> vector<2x256xf32>
    %240 = arith.addf %237, %239 : vector<2x256xf32>
    %241 = arith.negf %240 : vector<2x256xf32>
    %242 = math.exp %241 : vector<2x256xf32>
    %cst_49 = arith.constant 1.000000e+00 : f32
    %243 = vector.broadcast %cst_49 : f32 to vector<2x256xf32>
    %244 = arith.addf %243, %242 : vector<2x256xf32>
    %245 = arith.divf %243, %244 : vector<2x256xf32>
    %246 = math.tanh %240 : vector<2x256xf32>
    %247 = vector.extract_strided_slice %245 {offsets = [0, 0], sizes = [2, 32], strides = [1, 1]} : vector<2x256xf32> to vector<2x32xf32>
    %248 = vector.extract_strided_slice %245 {offsets = [0, 32], sizes = [2, 32], strides = [1, 1]} : vector<2x256xf32> to vector<2x32xf32>
    %249 = vector.extract_strided_slice %246 {offsets = [0, 64], sizes = [2, 32], strides = [1, 1]} : vector<2x256xf32> to vector<2x32xf32>
    %250 = vector.extract_strided_slice %245 {offsets = [0, 96], sizes = [2, 32], strides = [1, 1]} : vector<2x256xf32> to vector<2x32xf32>
    %251 = arith.mulf %248, %221 : vector<2x32xf32>
    %252 = arith.mulf %247, %249 : vector<2x32xf32>
    %253 = arith.addf %251, %252 : vector<2x32xf32>
    %254 = math.tanh %253 : vector<2x32xf32>
    %255 = arith.mulf %250, %254 : vector<2x32xf32>
    %256 = vector.extract_strided_slice %245 {offsets = [0, 128], sizes = [2, 32], strides = [1, 1]} : vector<2x256xf32> to vector<2x32xf32>
    %257 = vector.extract_strided_slice %245 {offsets = [0, 160], sizes = [2, 32], strides = [1, 1]} : vector<2x256xf32> to vector<2x32xf32>
    %258 = vector.extract_strided_slice %246 {offsets = [0, 192], sizes = [2, 32], strides = [1, 1]} : vector<2x256xf32> to vector<2x32xf32>
    %259 = vector.extract_strided_slice %245 {offsets = [0, 224], sizes = [2, 32], strides = [1, 1]} : vector<2x256xf32> to vector<2x32xf32>
    %260 = arith.mulf %257, %230 : vector<2x32xf32>
    %261 = arith.mulf %256, %258 : vector<2x32xf32>
    %262 = arith.addf %260, %261 : vector<2x32xf32>
    %263 = math.tanh %262 : vector<2x32xf32>
    %264 = arith.mulf %259, %263 : vector<2x32xf32>
    %c14_50 = arith.constant 14 : index
    %c0_51 = arith.constant 0 : index
    %265 = vector.load %arg10[%c14_50, %c0_51] : memref<16x64xf32, #tpu.memory_space<vmem>>, vector<2x32xf32>
    tpu.vector_store %arg10[%c14_50, %c0_51], %255 {strides = array<i32>} : memref<16x64xf32, #tpu.memory_space<vmem>>, vector<2x32xf32>,
    %c0_52 = arith.constant 0 : index
    %c32_53 = arith.constant 32 : index
    %266 = vector.load %arg10[%c0_52, %c32_53] : memref<16x64xf32, #tpu.memory_space<vmem>>, vector<2x32xf32>
    tpu.vector_store %arg10[%c0_52, %c32_53], %264 {strides = array<i32>} : memref<16x64xf32, #tpu.memory_space<vmem>>, vector<2x32xf32>,
    %c0_54 = arith.constant 0 : index
    %c0_55 = arith.constant 0 : index
    %267 = vector.load %arg10[%c0_54, %c0_55] : memref<16x64xf32, #tpu.memory_space<vmem>>, vector<16x64xf32>
    %cst_56 = arith.constant dense<0.000000e+00> : vector<16x256xf32>
    %268 = tpu.matmul %267, %3, %cst_56 {dimension_numbers = #tpu.dot_dimension_numbers<[1], [0], [0], [1], [0, 0, 1, 1], [], []>} : vector<16x64xf32>, vector<64x256xf32>, vector<16x256xf32> -> vector<16x256xf32>
    %269 = vector.broadcast %5 : vector<1x256xf32> to vector<16x256xf32>
    %270 = arith.addf %268, %269 : vector<16x256xf32>
    %271 = vector.extract_strided_slice %270 {offsets = [0, 0], sizes = [2, 128], strides = [1, 1]} : vector<16x256xf32> to vector<2x128xf32>
    %cst_57 = arith.constant dense<0.000000e+00> : vector<2x128xf32>
    %272 = tpu.matmul %10, %4, %cst_57 {dimension_numbers = #tpu.dot_dimension_numbers<[1], [0], [0], [1], [0, 0, 1, 1], [], []>} : vector<2x32xf32>, vector<32x128xf32>, vector<2x128xf32> -> vector<2x128xf32>
    %273 = arith.addf %271, %272 : vector<2x128xf32>
    %274 = arith.negf %273 : vector<2x128xf32>
    %275 = math.exp %274 : vector<2x128xf32>
    %cst_58 = arith.constant 1.000000e+00 : f32
    %276 = vector.broadcast %cst_58 : f32 to vector<2x128xf32>
    %277 = arith.addf %276, %275 : vector<2x128xf32>
    %278 = arith.divf %276, %277 : vector<2x128xf32>
    %279 = math.tanh %273 : vector<2x128xf32>
    %280 = vector.extract_strided_slice %278 {offsets = [0, 0], sizes = [2, 32], strides = [1, 1]} : vector<2x128xf32> to vector<2x32xf32>
    %281 = vector.extract_strided_slice %278 {offsets = [0, 32], sizes = [2, 32], strides = [1, 1]} : vector<2x128xf32> to vector<2x32xf32>
    %282 = vector.extract_strided_slice %279 {offsets = [0, 64], sizes = [2, 32], strides = [1, 1]} : vector<2x128xf32> to vector<2x32xf32>
    %283 = vector.extract_strided_slice %278 {offsets = [0, 96], sizes = [2, 32], strides = [1, 1]} : vector<2x128xf32> to vector<2x32xf32>
    %284 = arith.mulf %281, %10 : vector<2x32xf32>
    %285 = arith.mulf %280, %282 : vector<2x32xf32>
    %286 = arith.addf %284, %285 : vector<2x32xf32>
    %287 = math.tanh %286 : vector<2x32xf32>
    %288 = arith.mulf %283, %287 : vector<2x32xf32>
    %289 = vector.extract_strided_slice %270 {offsets = [2, 0], sizes = [2, 128], strides = [1, 1]} : vector<16x256xf32> to vector<2x128xf32>
    %cst_59 = arith.constant dense<0.000000e+00> : vector<2x128xf32>
    %290 = tpu.matmul %288, %4, %cst_59 {dimension_numbers = #tpu.dot_dimension_numbers<[1], [0], [0], [1], [0, 0, 1, 1], [], []>} : vector<2x32xf32>, vector<32x128xf32>, vector<2x128xf32> -> vector<2x128xf32>
    %291 = arith.addf %289, %290 : vector<2x128xf32>
    %292 = arith.negf %291 : vector<2x128xf32>
    %293 = math.exp %292 : vector<2x128xf32>
    %cst_60 = arith.constant 1.000000e+00 : f32
    %294 = vector.broadcast %cst_60 : f32 to vector<2x128xf32>
    %295 = arith.addf %294, %293 : vector<2x128xf32>
    %296 = arith.divf %294, %295 : vector<2x128xf32>
    %297 = math.tanh %291 : vector<2x128xf32>
    %298 = vector.extract_strided_slice %296 {offsets = [0, 0], sizes = [2, 32], strides = [1, 1]} : vector<2x128xf32> to vector<2x32xf32>
    %299 = vector.extract_strided_slice %296 {offsets = [0, 32], sizes = [2, 32], strides = [1, 1]} : vector<2x128xf32> to vector<2x32xf32>
    %300 = vector.extract_strided_slice %297 {offsets = [0, 64], sizes = [2, 32], strides = [1, 1]} : vector<2x128xf32> to vector<2x32xf32>
    %301 = vector.extract_strided_slice %296 {offsets = [0, 96], sizes = [2, 32], strides = [1, 1]} : vector<2x128xf32> to vector<2x32xf32>
    %302 = arith.mulf %299, %286 : vector<2x32xf32>
    %303 = arith.mulf %298, %300 : vector<2x32xf32>
    %304 = arith.addf %302, %303 : vector<2x32xf32>
    %305 = math.tanh %304 : vector<2x32xf32>
    %306 = arith.mulf %301, %305 : vector<2x32xf32>
    %307 = vector.extract_strided_slice %270 {offsets = [4, 0], sizes = [2, 128], strides = [1, 1]} : vector<16x256xf32> to vector<2x128xf32>
    %cst_61 = arith.constant dense<0.000000e+00> : vector<2x128xf32>
    %308 = tpu.matmul %306, %4, %cst_61 {dimension_numbers = #tpu.dot_dimension_numbers<[1], [0], [0], [1], [0, 0, 1, 1], [], []>} : vector<2x32xf32>, vector<32x128xf32>, vector<2x128xf32> -> vector<2x128xf32>
    %309 = arith.addf %307, %308 : vector<2x128xf32>
    %310 = arith.negf %309 : vector<2x128xf32>
    %311 = math.exp %310 : vector<2x128xf32>
    %cst_62 = arith.constant 1.000000e+00 : f32
    %312 = vector.broadcast %cst_62 : f32 to vector<2x128xf32>
    %313 = arith.addf %312, %311 : vector<2x128xf32>
    %314 = arith.divf %312, %313 : vector<2x128xf32>
    %315 = math.tanh %309 : vector<2x128xf32>
    %316 = vector.extract_strided_slice %314 {offsets = [0, 0], sizes = [2, 32], strides = [1, 1]} : vector<2x128xf32> to vector<2x32xf32>
    %317 = vector.extract_strided_slice %314 {offsets = [0, 32], sizes = [2, 32], strides = [1, 1]} : vector<2x128xf32> to vector<2x32xf32>
    %318 = vector.extract_strided_slice %315 {offsets = [0, 64], sizes = [2, 32], strides = [1, 1]} : vector<2x128xf32> to vector<2x32xf32>
    %319 = vector.extract_strided_slice %314 {offsets = [0, 96], sizes = [2, 32], strides = [1, 1]} : vector<2x128xf32> to vector<2x32xf32>
    %320 = arith.mulf %317, %304 : vector<2x32xf32>
    %321 = arith.mulf %316, %318 : vector<2x32xf32>
    %322 = arith.addf %320, %321 : vector<2x32xf32>
    %323 = math.tanh %322 : vector<2x32xf32>
    %324 = arith.mulf %319, %323 : vector<2x32xf32>
    %325 = vector.extract_strided_slice %270 {offsets = [6, 0], sizes = [2, 128], strides = [1, 1]} : vector<16x256xf32> to vector<2x128xf32>
    %cst_63 = arith.constant dense<0.000000e+00> : vector<2x128xf32>
    %326 = tpu.matmul %324, %4, %cst_63 {dimension_numbers = #tpu.dot_dimension_numbers<[1], [0], [0], [1], [0, 0, 1, 1], [], []>} : vector<2x32xf32>, vector<32x128xf32>, vector<2x128xf32> -> vector<2x128xf32>
    %327 = arith.addf %325, %326 : vector<2x128xf32>
    %328 = arith.negf %327 : vector<2x128xf32>
    %329 = math.exp %328 : vector<2x128xf32>
    %cst_64 = arith.constant 1.000000e+00 : f32
    %330 = vector.broadcast %cst_64 : f32 to vector<2x128xf32>
    %331 = arith.addf %330, %329 : vector<2x128xf32>
    %332 = arith.divf %330, %331 : vector<2x128xf32>
    %333 = math.tanh %327 : vector<2x128xf32>
    %334 = vector.extract_strided_slice %332 {offsets = [0, 0], sizes = [2, 32], strides = [1, 1]} : vector<2x128xf32> to vector<2x32xf32>
    %335 = vector.extract_strided_slice %332 {offsets = [0, 32], sizes = [2, 32], strides = [1, 1]} : vector<2x128xf32> to vector<2x32xf32>
    %336 = vector.extract_strided_slice %333 {offsets = [0, 64], sizes = [2, 32], strides = [1, 1]} : vector<2x128xf32> to vector<2x32xf32>
    %337 = vector.extract_strided_slice %332 {offsets = [0, 96], sizes = [2, 32], strides = [1, 1]} : vector<2x128xf32> to vector<2x32xf32>
    %338 = arith.mulf %335, %322 : vector<2x32xf32>
    %339 = arith.mulf %334, %336 : vector<2x32xf32>
    %340 = arith.addf %338, %339 : vector<2x32xf32>
    %341 = math.tanh %340 : vector<2x32xf32>
    %342 = arith.mulf %337, %341 : vector<2x32xf32>
    %343 = vector.extract_strided_slice %270 {offsets = [8, 0], sizes = [2, 128], strides = [1, 1]} : vector<16x256xf32> to vector<2x128xf32>
    %cst_65 = arith.constant dense<0.000000e+00> : vector<2x128xf32>
    %344 = tpu.matmul %342, %4, %cst_65 {dimension_numbers = #tpu.dot_dimension_numbers<[1], [0], [0], [1], [0, 0, 1, 1], [], []>} : vector<2x32xf32>, vector<32x128xf32>, vector<2x128xf32> -> vector<2x128xf32>
    %345 = arith.addf %343, %344 : vector<2x128xf32>
    %346 = arith.negf %345 : vector<2x128xf32>
    %347 = math.exp %346 : vector<2x128xf32>
    %cst_66 = arith.constant 1.000000e+00 : f32
    %348 = vector.broadcast %cst_66 : f32 to vector<2x128xf32>
    %349 = arith.addf %348, %347 : vector<2x128xf32>
    %350 = arith.divf %348, %349 : vector<2x128xf32>
    %351 = math.tanh %345 : vector<2x128xf32>
    %352 = vector.extract_strided_slice %350 {offsets = [0, 0], sizes = [2, 32], strides = [1, 1]} : vector<2x128xf32> to vector<2x32xf32>
    %353 = vector.extract_strided_slice %350 {offsets = [0, 32], sizes = [2, 32], strides = [1, 1]} : vector<2x128xf32> to vector<2x32xf32>
    %354 = vector.extract_strided_slice %351 {offsets = [0, 64], sizes = [2, 32], strides = [1, 1]} : vector<2x128xf32> to vector<2x32xf32>
    %355 = vector.extract_strided_slice %350 {offsets = [0, 96], sizes = [2, 32], strides = [1, 1]} : vector<2x128xf32> to vector<2x32xf32>
    %356 = arith.mulf %353, %340 : vector<2x32xf32>
    %357 = arith.mulf %352, %354 : vector<2x32xf32>
    %358 = arith.addf %356, %357 : vector<2x32xf32>
    %359 = math.tanh %358 : vector<2x32xf32>
    %360 = arith.mulf %355, %359 : vector<2x32xf32>
    %361 = vector.extract_strided_slice %270 {offsets = [10, 0], sizes = [2, 128], strides = [1, 1]} : vector<16x256xf32> to vector<2x128xf32>
    %cst_67 = arith.constant dense<0.000000e+00> : vector<2x128xf32>
    %362 = tpu.matmul %360, %4, %cst_67 {dimension_numbers = #tpu.dot_dimension_numbers<[1], [0], [0], [1], [0, 0, 1, 1], [], []>} : vector<2x32xf32>, vector<32x128xf32>, vector<2x128xf32> -> vector<2x128xf32>
    %363 = arith.addf %361, %362 : vector<2x128xf32>
    %364 = arith.negf %363 : vector<2x128xf32>
    %365 = math.exp %364 : vector<2x128xf32>
    %cst_68 = arith.constant 1.000000e+00 : f32
    %366 = vector.broadcast %cst_68 : f32 to vector<2x128xf32>
    %367 = arith.addf %366, %365 : vector<2x128xf32>
    %368 = arith.divf %366, %367 : vector<2x128xf32>
    %369 = math.tanh %363 : vector<2x128xf32>
    %370 = vector.extract_strided_slice %368 {offsets = [0, 0], sizes = [2, 32], strides = [1, 1]} : vector<2x128xf32> to vector<2x32xf32>
    %371 = vector.extract_strided_slice %368 {offsets = [0, 32], sizes = [2, 32], strides = [1, 1]} : vector<2x128xf32> to vector<2x32xf32>
    %372 = vector.extract_strided_slice %369 {offsets = [0, 64], sizes = [2, 32], strides = [1, 1]} : vector<2x128xf32> to vector<2x32xf32>
    %373 = vector.extract_strided_slice %368 {offsets = [0, 96], sizes = [2, 32], strides = [1, 1]} : vector<2x128xf32> to vector<2x32xf32>
    %374 = arith.mulf %371, %358 : vector<2x32xf32>
    %375 = arith.mulf %370, %372 : vector<2x32xf32>
    %376 = arith.addf %374, %375 : vector<2x32xf32>
    %377 = math.tanh %376 : vector<2x32xf32>
    %378 = arith.mulf %373, %377 : vector<2x32xf32>
    %379 = vector.extract_strided_slice %270 {offsets = [12, 0], sizes = [2, 128], strides = [1, 1]} : vector<16x256xf32> to vector<2x128xf32>
    %cst_69 = arith.constant dense<0.000000e+00> : vector<2x128xf32>
    %380 = tpu.matmul %378, %4, %cst_69 {dimension_numbers = #tpu.dot_dimension_numbers<[1], [0], [0], [1], [0, 0, 1, 1], [], []>} : vector<2x32xf32>, vector<32x128xf32>, vector<2x128xf32> -> vector<2x128xf32>
    %381 = arith.addf %379, %380 : vector<2x128xf32>
    %382 = arith.negf %381 : vector<2x128xf32>
    %383 = math.exp %382 : vector<2x128xf32>
    %cst_70 = arith.constant 1.000000e+00 : f32
    %384 = vector.broadcast %cst_70 : f32 to vector<2x128xf32>
    %385 = arith.addf %384, %383 : vector<2x128xf32>
    %386 = arith.divf %384, %385 : vector<2x128xf32>
    %387 = math.tanh %381 : vector<2x128xf32>
    %388 = vector.extract_strided_slice %386 {offsets = [0, 0], sizes = [2, 32], strides = [1, 1]} : vector<2x128xf32> to vector<2x32xf32>
    %389 = vector.extract_strided_slice %386 {offsets = [0, 32], sizes = [2, 32], strides = [1, 1]} : vector<2x128xf32> to vector<2x32xf32>
    %390 = vector.extract_strided_slice %387 {offsets = [0, 64], sizes = [2, 32], strides = [1, 1]} : vector<2x128xf32> to vector<2x32xf32>
    %391 = vector.extract_strided_slice %386 {offsets = [0, 96], sizes = [2, 32], strides = [1, 1]} : vector<2x128xf32> to vector<2x32xf32>
    %392 = arith.mulf %389, %376 : vector<2x32xf32>
    %393 = arith.mulf %388, %390 : vector<2x32xf32>
    %394 = arith.addf %392, %393 : vector<2x32xf32>
    %395 = math.tanh %394 : vector<2x32xf32>
    %396 = arith.mulf %391, %395 : vector<2x32xf32>
    %397 = vector.extract_strided_slice %270 {offsets = [14, 0], sizes = [2, 128], strides = [1, 1]} : vector<16x256xf32> to vector<2x128xf32>
    %cst_71 = arith.constant dense<0.000000e+00> : vector<2x128xf32>
    %398 = tpu.matmul %396, %4, %cst_71 {dimension_numbers = #tpu.dot_dimension_numbers<[1], [0], [0], [1], [0, 0, 1, 1], [], []>} : vector<2x32xf32>, vector<32x128xf32>, vector<2x128xf32> -> vector<2x128xf32>
    %399 = arith.addf %397, %398 : vector<2x128xf32>
    %400 = arith.negf %399 : vector<2x128xf32>
    %401 = math.exp %400 : vector<2x128xf32>
    %cst_72 = arith.constant 1.000000e+00 : f32
    %402 = vector.broadcast %cst_72 : f32 to vector<2x128xf32>
    %403 = arith.addf %402, %401 : vector<2x128xf32>
    %404 = arith.divf %402, %403 : vector<2x128xf32>
    %405 = math.tanh %399 : vector<2x128xf32>
    %406 = vector.extract_strided_slice %404 {offsets = [0, 0], sizes = [2, 32], strides = [1, 1]} : vector<2x128xf32> to vector<2x32xf32>
    %407 = vector.extract_strided_slice %404 {offsets = [0, 32], sizes = [2, 32], strides = [1, 1]} : vector<2x128xf32> to vector<2x32xf32>
    %408 = vector.extract_strided_slice %405 {offsets = [0, 64], sizes = [2, 32], strides = [1, 1]} : vector<2x128xf32> to vector<2x32xf32>
    %409 = vector.extract_strided_slice %404 {offsets = [0, 96], sizes = [2, 32], strides = [1, 1]} : vector<2x128xf32> to vector<2x32xf32>
    %410 = arith.mulf %407, %394 : vector<2x32xf32>
    %411 = arith.mulf %406, %408 : vector<2x32xf32>
    %412 = arith.addf %410, %411 : vector<2x32xf32>
    %413 = math.tanh %412 : vector<2x32xf32>
    %414 = arith.mulf %409, %413 : vector<2x32xf32>
    %415 = vector.extract_strided_slice %270 {offsets = [14, 128], sizes = [2, 128], strides = [1, 1]} : vector<16x256xf32> to vector<2x128xf32>
    %416 = arith.negf %415 : vector<2x128xf32>
    %417 = math.exp %416 : vector<2x128xf32>
    %cst_73 = arith.constant 1.000000e+00 : f32
    %418 = vector.broadcast %cst_73 : f32 to vector<2x128xf32>
    %419 = arith.addf %418, %417 : vector<2x128xf32>
    %420 = arith.divf %418, %419 : vector<2x128xf32>
    %421 = math.tanh %415 : vector<2x128xf32>
    %422 = vector.extract_strided_slice %420 {offsets = [0, 0], sizes = [2, 32], strides = [1, 1]} : vector<2x128xf32> to vector<2x32xf32>
    %423 = vector.extract_strided_slice %420 {offsets = [0, 32], sizes = [2, 32], strides = [1, 1]} : vector<2x128xf32> to vector<2x32xf32>
    %424 = vector.extract_strided_slice %421 {offsets = [0, 64], sizes = [2, 32], strides = [1, 1]} : vector<2x128xf32> to vector<2x32xf32>
    %425 = vector.extract_strided_slice %420 {offsets = [0, 96], sizes = [2, 32], strides = [1, 1]} : vector<2x128xf32> to vector<2x32xf32>
    %426 = arith.mulf %423, %10 : vector<2x32xf32>
    %427 = arith.mulf %422, %424 : vector<2x32xf32>
    %428 = arith.addf %426, %427 : vector<2x32xf32>
    %429 = math.tanh %428 : vector<2x32xf32>
    %430 = arith.mulf %425, %429 : vector<2x32xf32>
    %431 = tpu.concatenate %414, %430 in 1 : vector<2x32xf32>, vector<2x32xf32> -> vector<2x64xf32>
    %c0_74 = arith.constant 0 : index
    %c0_75 = arith.constant 0 : index
    %432 = vector.load %arg7[%c0_74, %c0_75] : memref<64x2xf32, #tpu.memory_space<vmem>>, vector<64x2xf32>
    %cst_76 = arith.constant dense<0.000000e+00> : vector<2x2xf32>
    %433 = tpu.matmul %431, %432, %cst_76 {dimension_numbers = #tpu.dot_dimension_numbers<[1], [0], [0], [1], [0, 0, 1, 1], [], []>} : vector<2x64xf32>, vector<64x2xf32>, vector<2x2xf32> -> vector<2x2xf32>
    %c0_77 = arith.constant 0 : index
    %c0_78 = arith.constant 0 : index
    %434 = vector.load %arg8[%c0_77, %c0_78] : memref<1x2xf32, #tpu.memory_space<vmem>>, vector<1x2xf32>
    %435 = vector.broadcast %434 : vector<1x2xf32> to vector<2x2xf32>
    %436 = arith.addf %433, %435 : vector<2x2xf32>
    %cst_79 = arith.constant dense<0xFF800000> : vector<2xf32>
    %437 = vector.multi_reduction <maximumf>, %436, %cst_79 [1] : vector<2x2xf32> to vector<2xf32>
    %438 = vector.shape_cast %437 : vector<2xf32> to vector<2x1xf32>
    %439 = vector.broadcast %438 : vector<2x1xf32> to vector<2x2xf32>
    %440 = arith.subf %436, %439 : vector<2x2xf32>
    %441 = math.exp %440 : vector<2x2xf32>
    %cst_80 = arith.constant dense<0.000000e+00> : vector<2xf32>
    %442 = vector.multi_reduction <add>, %441, %cst_80 [1] : vector<2x2xf32> to vector<2xf32>
    %443 = vector.shape_cast %442 : vector<2xf32> to vector<2x1xf32>
    %444 = vector.broadcast %443 : vector<2x1xf32> to vector<2x2xf32>
    %445 = arith.divf %441, %444 : vector<2x2xf32>
    %c0_81 = arith.constant 0 : index
    %c0_82 = arith.constant 0 : index
    %446 = vector.load %arg9[%c0_81, %c0_82] : memref<2x2xf32, #tpu.memory_space<vmem>>, vector<2x2xf32>
    tpu.vector_store %arg9[%c0_81, %c0_82], %445 {strides = array<i32>} : memref<2x2xf32, #tpu.memory_space<vmem>>, vector<2x2xf32>,
    return
  }
}

</mosaic_0001>

<llo_original>
// kernel: bilstm_forward.1
$region0: #{bilstm_forward.1}
  #allocation0 [shape = 'u32[]', space=smem, size = 0x4, offset = 0x4, fixed_abs, tag = 'smem constant byte address 0x4 - core index']
  #allocation1 [shape = 'u32[144,128]{1,0:T(1,128)}', space=vmem, size = 0x12000, scoped, tag = 'internal scratch']
  #allocation2 [shape = 'f32[16,64]{1,0:T(8,128)}', space=vmem, size = 0x2000, scoped, tag = 'scratch operand']
  %s0 = inlined_call_operand.vmem [shape: f32[16,32], index: 0, kind: input, shape index: {}]
  %s1 = inlined_call_operand.vmem [shape: f32[32,256], index: 1, kind: input, shape index: {}]
  %s2 = inlined_call_operand.vmem [shape: f32[64,256], index: 2, kind: input, shape index: {}]
  %s3 = inlined_call_operand.vmem [shape: f32[1,256], index: 3, kind: input, shape index: {}]
  %s4 = inlined_call_operand.vmem [shape: f32[64,256], index: 4, kind: input, shape index: {}]
  %s5 = inlined_call_operand.vmem [shape: f32[32,128], index: 5, kind: input, shape index: {}]
  %s6 = inlined_call_operand.vmem [shape: f32[1,256], index: 6, kind: input, shape index: {}]
  %s7 = inlined_call_operand.vmem [shape: f32[64,2], index: 7, kind: input, shape index: {}]
  %s8 = inlined_call_operand.vmem [shape: f32[1,2], index: 8, kind: input, shape index: {}]
  %s9 = inlined_call_operand.hbm [shape: f32[2,2], index: 9, kind: output, shape index: {}]
  %s10 = sld [smem:[#allocation0]]
  $region46: #{bilstm_forward.1} parent=0
    _
  %s12 = ssub.s32 1, %s10
  %s13 = scalar_select 0, %s12, %s10
  $region1: #{bilstm_forward.1} parent=0
    #allocation3 [shape = 'u8[1024]{0}', space=vmem, size = 0x400, scoped, tag = 'output window, operand 0, single buffered']
    #allocation4 [shape = 's32[1]{0}', space=sflag, size = 0x4, scoped, tag = 'scoped memory for bilstm_forward.1']
    %14 = vsyncpa [#allocation4], 0
    // Predicated region
    $region2: #{bilstm_forward.1} parent=1 // pred_check
      _
    $region3: #{bilstm_forward.1} parent=1 // pred_check_branch
      %16 = sbr.rel (0) target = $region5
    $region4: #{bilstm_forward.1} parent=1 // pred_region
      _
    $region5: #{bilstm_forward.1} parent=1 // pred_fallthru
      _
    // Predicated region
    $region6: #{bilstm_forward.1} parent=1 // pred_check
      _
    $region7: #{bilstm_forward.1} parent=1 // pred_check_branch
      %18 = sbr.rel (0) target = $region9
    $region8: #{bilstm_forward.1} parent=1 // pred_region
      _
    $region9: #{bilstm_forward.1} parent=1 // pred_fallthru
      _
    // Predicated region
    $region10: #{bilstm_forward.1} parent=1 // pred_check
      _
    $region11: #{bilstm_forward.1} parent=1 // pred_check_branch
      %20 = sbr.rel (0) target = $region13
    $region12: #{bilstm_forward.1} parent=1 // pred_region
      _
    $region13: #{bilstm_forward.1} parent=1 // pred_fallthru
      _
    // Predicated region
    $region14: #{bilstm_forward.1} parent=1 // pred_check
      _
    $region15: #{bilstm_forward.1} parent=1 // pred_check_branch
      %22 = sbr.rel (0) target = $region17
    $region16: #{bilstm_forward.1} parent=1 // pred_region
      _
    $region17: #{bilstm_forward.1} parent=1 // pred_fallthru
      _
    // Predicated region
    $region18: #{bilstm_forward.1} parent=1 // pred_check
      _
    $region19: #{bilstm_forward.1} parent=1 // pred_check_branch
      %24 = sbr.rel (0) target = $region21
    $region20: #{bilstm_forward.1} parent=1 // pred_region
      _
    $region21: #{bilstm_forward.1} parent=1 // pred_fallthru
      _
    // Predicated region
    $region22: #{bilstm_forward.1} parent=1 // pred_check
      _
    $region23: #{bilstm_forward.1} parent=1 // pred_check_branch
      %26 = sbr.rel (0) target = $region25
    $region24: #{bilstm_forward.1} parent=1 // pred_region
      _
    $region25: #{bilstm_forward.1} parent=1 // pred_fallthru
      _
    // Predicated region
    $region26: #{bilstm_forward.1} parent=1 // pred_check
      _
    $region27: #{bilstm_forward.1} parent=1 // pred_check_branch
      %28 = sbr.rel (0) target = $region29
    $region28: #{bilstm_forward.1} parent=1 // pred_region
      _
    $region29: #{bilstm_forward.1} parent=1 // pred_fallthru
      _
    // Predicated region
    $region30: #{bilstm_forward.1} parent=1 // pred_check
      _
    $region31: #{bilstm_forward.1} parent=1 // pred_check_branch
      %30 = sbr.rel (0) target = $region33
    $region32: #{bilstm_forward.1} parent=1 // pred_region
      _
    $region33: #{bilstm_forward.1} parent=1 // pred_fallthru
      _
    // Predicated region
    $region34: #{bilstm_forward.1} parent=1 // pred_check
      _
    $region35: #{bilstm_forward.1} parent=1 // pred_check_branch
      %32 = sbr.rel (0) target = $region37
    $region36: #{bilstm_forward.1} parent=1 // pred_region
      _
    $region37: #{bilstm_forward.1} parent=1 // pred_fallthru
      _
    %v33 = vld [vmem:[%s1] sm:$0xff]
    %v34 = vld [vmem:[%s1 + $0x8] sm:$0xff]
    %v35 = vld [vmem:[%s1 + $0x10] sm:$0xff]
    %v36 = vld [vmem:[%s1 + $0x18] sm:$0xff]
    %v37 = vld [vmem:[%s1 + $0x20] sm:$0xff]
    %v38 = vld [vmem:[%s1 + $0x28] sm:$0xff]
    %v39 = vld [vmem:[%s1 + $0x30] sm:$0xff]
    %v40 = vld [vmem:[%s1 + $0x38] sm:$0xff]
    %v41 = vld [vmem:[%s2] sm:$0xff]
    %v42 = vld [vmem:[%s2 + $0x8] sm:$0xff]
    %v43 = vld [vmem:[%s2 + $0x10] sm:$0xff]
    %v44 = vld [vmem:[%s2 + $0x18] sm:$0xff]
    %v45 = vld [vmem:[%s2 + $0x20] sm:$0xff]
    %v46 = vld [vmem:[%s2 + $0x28] sm:$0xff]
    %v47 = vld [vmem:[%s2 + $0x30] sm:$0xff]
    %v48 = vld [vmem:[%s2 + $0x38] sm:$0xff]
    %v49 = vld [vmem:[%s2 + $0x40] sm:$0xff]
    %v50 = vld [vmem:[%s2 + $0x48] sm:$0xff]
    %v51 = vld [vmem:[%s2 + $0x50] sm:$0xff]
    %v52 = vld [vmem:[%s2 + $0x58] sm:$0xff]
    %v53 = vld [vmem:[%s2 + $0x60] sm:$0xff]
    %v54 = vld [vmem:[%s2 + $0x68] sm:$0xff]
    %v55 = vld [vmem:[%s2 + $0x70] sm:$0xff]
    %v56 = vld [vmem:[%s2 + $0x78] sm:$0xff]
    %v57 = vld [vmem:[%s3] sm:$0x3]
    %v58 = vld [vmem:[%s4] sm:$0xff]
    %v59 = vld [vmem:[%s4 + $0x8] sm:$0xff]
    %v60 = vld [vmem:[%s4 + $0x10] sm:$0xff]
    %v61 = vld [vmem:[%s4 + $0x18] sm:$0xff]
    %v62 = vld [vmem:[%s4 + $0x20] sm:$0xff]
    %v63 = vld [vmem:[%s4 + $0x28] sm:$0xff]
    %v64 = vld [vmem:[%s4 + $0x30] sm:$0xff]
    %v65 = vld [vmem:[%s4 + $0x38] sm:$0xff]
    %v66 = vld [vmem:[%s4 + $0x40] sm:$0xff]
    %v67 = vld [vmem:[%s4 + $0x48] sm:$0xff]
    %v68 = vld [vmem:[%s4 + $0x50] sm:$0xff]
    %v69 = vld [vmem:[%s4 + $0x58] sm:$0xff]
    %v70 = vld [vmem:[%s4 + $0x60] sm:$0xff]
    %v71 = vld [vmem:[%s4 + $0x68] sm:$0xff]
    %v72 = vld [vmem:[%s4 + $0x70] sm:$0xff]
    %v73 = vld [vmem:[%s4 + $0x78] sm:$0xff]
    %v74 = vld [vmem:[%s5] sm:$0xff]
    %v75 = vld [vmem:[%s5 + $0x8] sm:$0xff]
    %v76 = vld [vmem:[%s5 + $0x10] sm:$0xff]
    %v77 = vld [vmem:[%s5 + $0x18] sm:$0xff]
    %v78 = vld [vmem:[%s6] sm:$0x3]
    %v79 = vld [vmem:[%s0] sm:$0xff]
    %v80 = vld [vmem:[%s0 + $0x8] sm:$0xff]
    %v82 = vlaneseq
    %v83 = vshrl.u32 %v82, 7
    %v84 = vsub.s32 0, %v83
    %v85 = vrot.slane %v57, %v84
    %v86 = vlaneseq
    %v87 = vshrl.u32 %v86, 7
    %v88 = vsub.s32 1, %v87
    %v89 = vrot.slane %v57, %v88
    %vm92 = vcmask 261120
    %v94 = vsel %vm92, %v79, 0
    %v97 = vsel %vm92, %v80, 0
    %99 = vmatprep.subr.mxu0 %v34
    %100 = vmatpush1.msra.mxu0 %v33
    %101 = vmatprep.subr.mxu0 %v36
    %102 = vmatpush1.msra.mxu0 %v35
    %103 = vmatprep.subr.mxu0 %v38
    %104 = vmatpush1.msra.mxu0 %v37
    %105 = vmatprep.subr.mxu0 %v40
    %106 = vmatpush1.msra.mxu0 %v39
    %107 = vmatprep.subr.mxu0 0.0
    %108 = vmatpush1.msra.mxu0 0.0
    %109 = vmatprep.subr.mxu0 0.0
    %110 = vmatpush1.msra.mxu0 0.0
    %111 = vmatprep.subr.mxu0 0.0
    %112 = vmatpush1.msra.mxu0 0.0
    %113 = vmatprep.subr.mxu0 0.0
    %114 = vmatpush1.msra.mxu0 0.0
    %115 = vmatprep.subr.mxu0 0.0
    %116 = vmatpush1.msra.mxu0 0.0
    %117 = vmatprep.subr.mxu0 0.0
    %118 = vmatpush1.msra.mxu0 0.0
    %119 = vmatprep.subr.mxu0 0.0
    %120 = vmatpush1.msra.mxu0 0.0
    %121 = vmatprep.subr.mxu0 0.0
    %122 = vmatpush1.msra.mxu0 0.0
    %123 = vmatprep.subr.mxu0 0.0
    %124 = vmatpush1.msra.mxu0 0.0
    %125 = vmatprep.subr.mxu0 0.0
    %126 = vmatpush1.msra.mxu0 0.0
    %127 = vmatprep.subr.mxu0 0.0
    %128 = vmatpush1.msra.mxu0 0.0
    %129 = vmatprep.subr.mxu0 0.0
    %130 = vmatpush1.msra.mxu0 0.0
    %131 = vmatprep.subr.mxu0 0.0
    %132 = vmatpush1.msra.mxu0 0.0
    %133 = vmatprep.subr.mxu0 0.0
    %134 = vmatpush1.msra.mxu0 0.0
    %135 = vmatprep.subr.mxu0 0.0
    %136 = vmatpush1.msra.mxu0 0.0
    %137 = vmatprep.subr.mxu0 0.0
    %138 = vmatpush1.msra.mxu0 0.0
    %139 = vmatprep.subr.mxu0 0.0
    %140 = vmatpush1.msra.mxu0 0.0
    %141 = vmatprep.subr.mxu0 0.0
    %142 = vmatpush1.msra.mxu0 0.0
    %143 = vmatprep.subr.mxu0 0.0
    %144 = vmatpush1.msra.mxu0 0.0
    %145 = vmatprep.subr.mxu0 0.0
    %146 = vmatpush1.msra.mxu0 0.0
    %147 = vmatprep.subr.mxu0 0.0
    %148 = vmatpush1.msra.mxu0 0.0
    %149 = vmatprep.subr.mxu0 0.0
    %150 = vmatpush1.msra.mxu0 0.0
    %151 = vmatprep.subr.mxu0 0.0
    %152 = vmatpush1.msra.mxu0 0.0
    %153 = vmatprep.subr.mxu0 0.0
    %154 = vmatpush1.msra.mxu0 0.0
    %155 = vmatprep.subr.mxu0 0.0
    %156 = vmatpush1.msra.mxu0 0.0
    %157 = vmatprep.subr.mxu0 0.0
    %158 = vmatpush1.msra.mxu0 0.0
    %159 = vmatprep.subr.mxu0 0.0
    %160 = vmatpush1.msra.mxu0 0.0
    %161 = vmatprep.subr.mxu0 0.0
    %162 = vmatpush1.msra.mxu0 0.0
    %163 = vmatprep.mubr.f32.mxu0 0.0
    %164 = vmatmul.mubr.f32.gmra.mrb[0].mxu0 %v94
    %v165 = vpop.f32.mrb[0].mxu0
    %v166 = vadd.f32 %v85, %v165
    %v167 = vpop.f32.mrb[0].mxu0
    %v168 = vadd.f32 %v89, %v167
    %169 = vmatprep.mubr.f32.mxu0 0.0
    %170 = vmatmul.mubr.f32.gmra.mrb[0].mxu0 %v97
    %v171 = vpop.f32.mrb[0].mxu0
    %v172 = vadd.f32 %v85, %v171
    %v173 = vpop.f32.mrb[0].mxu0
    %v174 = vadd.f32 %v89, %v173
    %175 = vdwg.mxu0
    %v177 = vrot.slane %v174, 6
    %vm179 = vcmask 523264
    %v181 = vsel %vm179, 0.0, 0
    %183 = vmatprep.subr.mxu0 %v42
    %184 = vmatpush1.msra.mxu0 %v41
    %185 = vmatprep.subr.mxu0 %v44
    %186 = vmatpush1.msra.mxu0 %v43
    %187 = vmatprep.subr.mxu0 %v46
    %188 = vmatpush1.msra.mxu0 %v45
    %189 = vmatprep.subr.mxu0 %v48
    %190 = vmatpush1.msra.mxu0 %v47
    %191 = vmatprep.subr.mxu0 %v50
    %192 = vmatpush1.msra.mxu0 %v49
    %193 = vmatprep.subr.mxu0 %v52
    %194 = vmatpush1.msra.mxu0 %v51
    %195 = vmatprep.subr.mxu0 %v54
    %196 = vmatpush1.msra.mxu0 %v53
    %197 = vmatprep.subr.mxu0 %v56
    %198 = vmatpush1.msra.mxu0 %v55
    %199 = vmatprep.subr.mxu0 0.0
    %200 = vmatpush1.msra.mxu0 0.0
    %201 = vmatprep.subr.mxu0 0.0
    %202 = vmatpush1.msra.mxu0 0.0
    %203 = vmatprep.subr.mxu0 0.0
    %204 = vmatpush1.msra.mxu0 0.0
    %205 = vmatprep.subr.mxu0 0.0
    %206 = vmatpush1.msra.mxu0 0.0
    %207 = vmatprep.subr.mxu0 0.0
    %208 = vmatpush1.msra.mxu0 0.0
    %209 = vmatprep.subr.mxu0 0.0
    %210 = vmatpush1.msra.mxu0 0.0
    %211 = vmatprep.subr.mxu0 0.0
    %212 = vmatpush1.msra.mxu0 0.0
    %213 = vmatprep.subr.mxu0 0.0
    %214 = vmatpush1.msra.mxu0 0.0
    %215 = vmatprep.subr.mxu0 0.0
    %216 = vmatpush1.msra.mxu0 0.0
    %217 = vmatprep.subr.mxu0 0.0
    %218 = vmatpush1.msra.mxu0 0.0
    %219 = vmatprep.subr.mxu0 0.0
    %220 = vmatpush1.msra.mxu0 0.0
    %221 = vmatprep.subr.mxu0 0.0
    %222 = vmatpush1.msra.mxu0 0.0
    %223 = vmatprep.subr.mxu0 0.0
    %224 = vmatpush1.msra.mxu0 0.0
    %225 = vmatprep.subr.mxu0 0.0
    %226 = vmatpush1.msra.mxu0 0.0
    %227 = vmatprep.subr.mxu0 0.0
    %228 = vmatpush1.msra.mxu0 0.0
    %229 = vmatprep.subr.mxu0 0.0
    %230 = vmatpush1.msra.mxu0 0.0
    %231 = vmatprep.subr.mxu0 0.0
    %232 = vmatpush1.msra.mxu0 0.0
    %233 = vmatprep.subr.mxu0 0.0
    %234 = vmatpush1.msra.mxu0 0.0
    %235 = vmatprep.subr.mxu0 0.0
    %236 = vmatpush1.msra.mxu0 0.0
    %237 = vmatprep.subr.mxu0 0.0
    %238 = vmatpush1.msra.mxu0 0.0
    %239 = vmatprep.subr.mxu0 0.0
    %240 = vmatpush1.msra.mxu0 0.0
    %241 = vmatprep.subr.mxu0 0.0
    %242 = vmatpush1.msra.mxu0 0.0
    %243 = vmatprep.subr.mxu0 0.0
    %244 = vmatpush1.msra.mxu0 0.0
    %245 = vmatprep.subr.mxu0 0.0
    %246 = vmatpush1.msra.mxu0 0.0
    %247 = vmatprep.mubr.f32.mxu0 0.0
    %248 = vmatmul.mubr.f32.gmra.mrb[0].mxu0 %v181
    %v249 = vpop.f32.mrb[0].mxu0
    %v250 = vadd.f32 0.0, %v249
    %v251 = vpop.f32.mrb[0].mxu0
    %v252 = vadd.f32 0.0, %v251
    %253 = vdwg.mxu0
    %v254 = vadd.f32 %v166, %v250
    %v255 = vadd.f32 %v177, %v252
    %v256 = vxor.u32 %v254, 2147483648
    %v257 = vxor.u32 %v255, 2147483648
    %v258 = vmul.f32 %v256, 1.442695
    %v259 = vpow.pop %v258
    %v260 = vmul.f32 %v257, 1.442695
    %v261 = vpow.pop %v260
    %v262 = vadd.f32 %v259, 1.0
    %v263 = vadd.f32 %v261, 1.0
    %v264 = vrcp.pop %v262
    %v265 = vmul.f32 1.0, %v264
    %v266 = vrcp.pop %v263
    %v267 = vmul.f32 1.0, %v266
    %v268 = vtanh.pop %v254
    %v269 = vtanh.pop %v255
    %v270 = vmul.f32 %v265, 0.0
    %272 = vrot.lane.b32.xlu0 %v268, 64
    %v273 = vpop.permute.xlu0 %272
    %v275 = vmul.f32 %v265, %v273
    %277 = vrot.lane.b32.xlu0 %v275, 32
    %v278 = vpop.permute.xlu0 %277
    %v280 = vadd.f32 %v270, %v278
    %v281 = vtanh.pop %v280
    %283 = vrot.lane.b32.xlu0 %v281, 64
    %v284 = vpop.permute.xlu0 %283
    %v286 = vmul.f32 %v265, %v284
    %v287 = vmul.f32 %v267, 0.0
    %289 = vrot.lane.b32.xlu0 %v269, 64
    %v290 = vpop.permute.xlu0 %289
    %v292 = vmul.f32 %v267, %v290
    %294 = vrot.lane.b32.xlu0 %v292, 32
    %v295 = vpop.permute.xlu0 %294
    %v297 = vadd.f32 %v287, %v295
    %v298 = vtanh.pop %v297
    %300 = vrot.lane.b32.xlu0 %v298, 64
    %v301 = vpop.permute.xlu0 %300
    %v303 = vmul.f32 %v267, %v301
    %305 = vrot.lane.b32.xlu0 %v286, 32
    %v306 = vpop.permute.xlu0 %305
    %vm308 = vcmask 254976
    %309 = vst.msk [vmem:[#allocation2] sm:$0x3] %vm308, %v306
    %311 = vrot.lane.b32.xlu0 %v303, 64
    %v312 = vpop.permute.xlu0 %311
    %vm314 = vcmask 517376
    %315 = vst.msk [vmem:[#allocation2 + $0xe] sm:$0x3] %vm314, %v312
    %v316 = vrot.slane %v174, 2
    %v318 = vsel %vm92, %v306, %v312
    %v320 = vsel %vm179, %v318, 0
    %322 = vmatprep.subr.mxu0 %v42
    %323 = vmatpush1.msra.mxu0 %v41
    %324 = vmatprep.subr.mxu0 %v44
    %325 = vmatpush1.msra.mxu0 %v43
    %326 = vmatprep.subr.mxu0 %v46
    %327 = vmatpush1.msra.mxu0 %v45
    %328 = vmatprep.subr.mxu0 %v48
    %329 = vmatpush1.msra.mxu0 %v47
    %330 = vmatprep.subr.mxu0 %v50
    %331 = vmatpush1.msra.mxu0 %v49
    %332 = vmatprep.subr.mxu0 %v52
    %333 = vmatpush1.msra.mxu0 %v51
    %334 = vmatprep.subr.mxu0 %v54
    %335 = vmatpush1.msra.mxu0 %v53
    %336 = vmatprep.subr.mxu0 %v56
    %337 = vmatpush1.msra.mxu0 %v55
    %338 = vmatprep.subr.mxu0 0.0
    %339 = vmatpush1.msra.mxu0 0.0
    %340 = vmatprep.subr.mxu0 0.0
    %341 = vmatpush1.msra.mxu0 0.0
    %342 = vmatprep.subr.mxu0 0.0
    %343 = vmatpush1.msra.mxu0 0.0
    %344 = vmatprep.subr.mxu0 0.0
    %345 = vmatpush1.msra.mxu0 0.0
    %346 = vmatprep.subr.mxu0 0.0
    %347 = vmatpush1.msra.mxu0 0.0
    %348 = vmatprep.subr.mxu0 0.0
    %349 = vmatpush1.msra.mxu0 0.0
    %350 = vmatprep.subr.mxu0 0.0
    %351 = vmatpush1.msra.mxu0 0.0
    %352 = vmatprep.subr.mxu0 0.0
    %353 = vmatpush1.msra.mxu0 0.0
    %354 = vmatprep.subr.mxu0 0.0
    %355 = vmatpush1.msra.mxu0 0.0
    %356 = vmatprep.subr.mxu0 0.0
    %357 = vmatpush1.msra.mxu0 0.0
    %358 = vmatprep.subr.mxu0 0.0
    %359 = vmatpush1.msra.mxu0 0.0
    %360 = vmatprep.subr.mxu0 0.0
    %361 = vmatpush1.msra.mxu0 0.0
    %362 = vmatprep.subr.mxu0 0.0
    %363 = vmatpush1.msra.mxu0 0.0
    %364 = vmatprep.subr.mxu0 0.0
    %365 = vmatpush1.msra.mxu0 0.0
    %366 = vmatprep.subr.mxu0 0.0
    %367 = vmatpush1.msra.mxu0 0.0
    %368 = vmatprep.subr.mxu0 0.0
    %369 = vmatpush1.msra.mxu0 0.0
    %370 = vmatprep.subr.mxu0 0.0
    %371 = vmatpush1.msra.mxu0 0.0
    %372 = vmatprep.subr.mxu0 0.0
    %373 = vmatpush1.msra.mxu0 0.0
    %374 = vmatprep.subr.mxu0 0.0
    %375 = vmatpush1.msra.mxu0 0.0
    %376 = vmatprep.subr.mxu0 0.0
    %377 = vmatpush1.msra.mxu0 0.0
    %378 = vmatprep.subr.mxu0 0.0
    %379 = vmatpush1.msra.mxu0 0.0
    %380 = vmatprep.subr.mxu0 0.0
    %381 = vmatpush1.msra.mxu0 0.0
    %382 = vmatprep.subr.mxu0 0.0
    %383 = vmatpush1.msra.mxu0 0.0
    %384 = vmatprep.subr.mxu0 0.0
    %385 = vmatpush1.msra.mxu0 0.0
    %386 = vmatprep.mubr.f32.mxu0 0.0
    %387 = vmatmul.mubr.f32.gmra.mrb[0].mxu0 %v320
    %v388 = vpop.f32.mrb[0].mxu0
    %v389 = vadd.f32 0.0, %v388
    %v390 = vpop.f32.mrb[0].mxu0
    %v391 = vadd.f32 0.0, %v390
    %392 = vdwg.mxu0
    %v395 = vrot.slane %v389, 6
    %v396 = vrot.slane %v391, 6
    %v399 = vadd.f32 %v166, %v395
    %v400 = vadd.f32 %v316, %v396
    %v401 = vxor.u32 %v399, 2147483648
    %v402 = vxor.u32 %v400, 2147483648
    %v403 = vmul.f32 %v401, 1.442695
    %v404 = vpow.pop %v403
    %v405 = vmul.f32 %v402, 1.442695
    %v406 = vpow.pop %v405
    %v407 = vadd.f32 %v404, 1.0
    %v408 = vadd.f32 %v406, 1.0
    %v409 = vrcp.pop %v407
    %v410 = vmul.f32 1.0, %v409
    %v411 = vrcp.pop %v408
    %v412 = vmul.f32 1.0, %v411
    %v413 = vtanh.pop %v399
    %v414 = vtanh.pop %v400
    %v416 = vrot.slane %v280, 6
    %v418 = vmul.f32 %v410, %v416
    %420 = vrot.lane.b32.xlu0 %v413, 64
    %v421 = vpop.permute.xlu0 %420
    %v423 = vmul.f32 %v410, %v421
    %425 = vrot.lane.b32.xlu0 %v423, 32
    %v426 = vpop.permute.xlu0 %425
    %v428 = vadd.f32 %v418, %v426
    %v429 = vtanh.pop %v428
    %431 = vrot.lane.b32.xlu0 %v429, 64
    %v432 = vpop.permute.xlu0 %431
    %v434 = vmul.f32 %v410, %v432
    %v436 = vrot.slane %v297, 6
    %v438 = vmul.f32 %v412, %v436
    %440 = vrot.lane.b32.xlu0 %v414, 64
    %v441 = vpop.permute.xlu0 %440
    %v443 = vmul.f32 %v412, %v441
    %445 = vrot.lane.b32.xlu0 %v443, 32
    %v446 = vpop.permute.xlu0 %445
    %v448 = vadd.f32 %v438, %v446
    %v449 = vtanh.pop %v448
    %451 = vrot.lane.b32.xlu0 %v449, 64
    %v452 = vpop.permute.xlu0 %451
    %v454 = vmul.f32 %v412, %v452
    %456 = vrot.lane.b32.xlu0 %v434, 32
    %v457 = vpop.permute.xlu0 %456
    %vm459 = vcmask 257026
    %460 = vst.msk [vmem:[#allocation2] sm:$0xc] %vm459, %v457
    %462 = vrot.lane.b32.xlu0 %v454, 64
    %v463 = vpop.permute.xlu0 %462
    %vm465 = vcmask 519426
    %466 = vst.msk [vmem:[#allocation2 + $0xa] sm:$0xc] %vm465, %v463
    %v467 = vsel %vm92, %v457, %v463
    %v469 = vrot.slane %v467, 2
    %v470 = vsel %vm179, %v469, 0
    %472 = vmatprep.subr.mxu0 %v42
    %473 = vmatpush1.msra.mxu0 %v41
    %474 = vmatprep.subr.mxu0 %v44
    %475 = vmatpush1.msra.mxu0 %v43
    %476 = vmatprep.subr.mxu0 %v46
    %477 = vmatpush1.msra.mxu0 %v45
    %478 = vmatprep.subr.mxu0 %v48
    %479 = vmatpush1.msra.mxu0 %v47
    %480 = vmatprep.subr.mxu0 %v50
    %481 = vmatpush1.msra.mxu0 %v49
    %482 = vmatprep.subr.mxu0 %v52
    %483 = vmatpush1.msra.mxu0 %v51
    %484 = vmatprep.subr.mxu0 %v54
    %485 = vmatpush1.msra.mxu0 %v53
    %486 = vmatprep.subr.mxu0 %v56
    %487 = vmatpush1.msra.mxu0 %v55
    %488 = vmatprep.subr.mxu0 0.0
    %489 = vmatpush1.msra.mxu0 0.0
    %490 = vmatprep.subr.mxu0 0.0
    %491 = vmatpush1.msra.mxu0 0.0
    %492 = vmatprep.subr.mxu0 0.0
    %493 = vmatpush1.msra.mxu0 0.0
    %494 = vmatprep.subr.mxu0 0.0
    %495 = vmatpush1.msra.mxu0 0.0
    %496 = vmatprep.subr.mxu0 0.0
    %497 = vmatpush1.msra.mxu0 0.0
    %498 = vmatprep.subr.mxu0 0.0
    %499 = vmatpush1.msra.mxu0 0.0
    %500 = vmatprep.subr.mxu0 0.0
    %501 = vmatpush1.msra.mxu0 0.0
    %502 = vmatprep.subr.mxu0 0.0
    %503 = vmatpush1.msra.mxu0 0.0
    %504 = vmatprep.subr.mxu0 0.0
    %505 = vmatpush1.msra.mxu0 0.0
    %506 = vmatprep.subr.mxu0 0.0
    %507 = vmatpush1.msra.mxu0 0.0
    %508 = vmatprep.subr.mxu0 0.0
    %509 = vmatpush1.msra.mxu0 0.0
    %510 = vmatprep.subr.mxu0 0.0
    %511 = vmatpush1.msra.mxu0 0.0
    %512 = vmatprep.subr.mxu0 0.0
    %513 = vmatpush1.msra.mxu0 0.0
    %514 = vmatprep.subr.mxu0 0.0
    %515 = vmatpush1.msra.mxu0 0.0
    %516 = vmatprep.subr.mxu0 0.0
    %517 = vmatpush1.msra.mxu0 0.0
    %518 = vmatprep.subr.mxu0 0.0
    %519 = vmatpush1.msra.mxu0 0.0
    %520 = vmatprep.subr.mxu0 0.0
    %521 = vmatpush1.msra.mxu0 0.0
    %522 = vmatprep.subr.mxu0 0.0
    %523 = vmatpush1.msra.mxu0 0.0
    %524 = vmatprep.subr.mxu0 0.0
    %525 = vmatpush1.msra.mxu0 0.0
    %526 = vmatprep.subr.mxu0 0.0
    %527 = vmatpush1.msra.mxu0 0.0
    %528 = vmatprep.subr.mxu0 0.0
    %529 = vmatpush1.msra.mxu0 0.0
    %530 = vmatprep.subr.mxu0 0.0
    %531 = vmatpush1.msra.mxu0 0.0
    %532 = vmatprep.subr.mxu0 0.0
    %533 = vmatpush1.msra.mxu0 0.0
    %534 = vmatprep.subr.mxu0 0.0
    %535 = vmatpush1.msra.mxu0 0.0
    %536 = vmatprep.mubr.f32.mxu0 0.0
    %537 = vmatmul.mubr.f32.gmra.mrb[0].mxu0 %v470
    %v538 = vpop.f32.mrb[0].mxu0
    %v539 = vadd.f32 0.0, %v538
    %v540 = vpop.f32.mrb[0].mxu0
    %v541 = vadd.f32 0.0, %v540
    %542 = vdwg.mxu0
    %v545 = vrot.slane %v539, 4
    %v546 = vrot.slane %v541, 4
    %v549 = vadd.f32 %v166, %v545
    %v550 = vadd.f32 %v177, %v546
    %v551 = vxor.u32 %v549, 2147483648
    %v552 = vxor.u32 %v550, 2147483648
    %v553 = vmul.f32 %v551, 1.442695
    %v554 = vpow.pop %v553
    %v555 = vmul.f32 %v552, 1.442695
    %v556 = vpow.pop %v555
    %v557 = vadd.f32 %v554, 1.0
    %v558 = vadd.f32 %v556, 1.0
    %v559 = vrcp.pop %v557
    %v560 = vmul.f32 1.0, %v559
    %v561 = vrcp.pop %v558
    %v562 = vmul.f32 1.0, %v561
    %v563 = vtanh.pop %v549
    %v564 = vtanh.pop %v550
    %v566 = vrot.slane %v428, 6
    %v568 = vmul.f32 %v560, %v566
    %570 = vrot.lane.b32.xlu0 %v563, 64
    %v571 = vpop.permute.xlu0 %570
    %v573 = vmul.f32 %v560, %v571
    %575 = vrot.lane.b32.xlu0 %v573, 32
    %v576 = vpop.permute.xlu0 %575
    %v578 = vadd.f32 %v568, %v576
    %v579 = vtanh.pop %v578
    %581 = vrot.lane.b32.xlu0 %v579, 64
    %v582 = vpop.permute.xlu0 %581
    %v584 = vmul.f32 %v560, %v582
    %v586 = vrot.slane %v448, 6
    %v588 = vmul.f32 %v562, %v586
    %590 = vrot.lane.b32.xlu0 %v564, 64
    %v591 = vpop.permute.xlu0 %590
    %v593 = vmul.f32 %v562, %v591
    %595 = vrot.lane.b32.xlu0 %v593, 32
    %v596 = vpop.permute.xlu0 %595
    %v598 = vadd.f32 %v588, %v596
    %v599 = vtanh.pop %v598
    %601 = vrot.lane.b32.xlu0 %v599, 64
    %v602 = vpop.permute.xlu0 %601
    %v604 = vmul.f32 %v562, %v602
    %606 = vrot.lane.b32.xlu0 %v584, 32
    %v607 = vpop.permute.xlu0 %606
    %vm609 = vcmask 259076
    %610 = vst.msk [vmem:[#allocation2] sm:$0x30] %vm609, %v607
    %612 = vrot.lane.b32.xlu0 %v604, 64
    %v613 = vpop.permute.xlu0 %612
    %vm615 = vcmask 521476
    %616 = vst.msk [vmem:[#allocation2 + $0x6] sm:$0x30] %vm615, %v613
    %v617 = vsel %vm92, %v607, %v613
    %v619 = vrot.slane %v617, 4
    %v620 = vsel %vm179, %v619, 0
    %622 = vmatprep.subr.mxu0 %v42
    %623 = vmatpush1.msra.mxu0 %v41
    %624 = vmatprep.subr.mxu0 %v44
    %625 = vmatpush1.msra.mxu0 %v43
    %626 = vmatprep.subr.mxu0 %v46
    %627 = vmatpush1.msra.mxu0 %v45
    %628 = vmatprep.subr.mxu0 %v48
    %629 = vmatpush1.msra.mxu0 %v47
    %630 = vmatprep.subr.mxu0 %v50
    %631 = vmatpush1.msra.mxu0 %v49
    %632 = vmatprep.subr.mxu0 %v52
    %633 = vmatpush1.msra.mxu0 %v51
    %634 = vmatprep.subr.mxu0 %v54
    %635 = vmatpush1.msra.mxu0 %v53
    %636 = vmatprep.subr.mxu0 %v56
    %637 = vmatpush1.msra.mxu0 %v55
    %638 = vmatprep.subr.mxu0 0.0
    %639 = vmatpush1.msra.mxu0 0.0
    %640 = vmatprep.subr.mxu0 0.0
    %641 = vmatpush1.msra.mxu0 0.0
    %642 = vmatprep.subr.mxu0 0.0
    %643 = vmatpush1.msra.mxu0 0.0
    %644 = vmatprep.subr.mxu0 0.0
    %645 = vmatpush1.msra.mxu0 0.0
    %646 = vmatprep.subr.mxu0 0.0
    %647 = vmatpush1.msra.mxu0 0.0
    %648 = vmatprep.subr.mxu0 0.0
    %649 = vmatpush1.msra.mxu0 0.0
    %650 = vmatprep.subr.mxu0 0.0
    %651 = vmatpush1.msra.mxu0 0.0
    %652 = vmatprep.subr.mxu0 0.0
    %653 = vmatpush1.msra.mxu0 0.0
    %654 = vmatprep.subr.mxu0 0.0
    %655 = vmatpush1.msra.mxu0 0.0
    %656 = vmatprep.subr.mxu0 0.0
    %657 = vmatpush1.msra.mxu0 0.0
    %658 = vmatprep.subr.mxu0 0.0
    %659 = vmatpush1.msra.mxu0 0.0
    %660 = vmatprep.subr.mxu0 0.0
    %661 = vmatpush1.msra.mxu0 0.0
    %662 = vmatprep.subr.mxu0 0.0
    %663 = vmatpush1.msra.mxu0 0.0
    %664 = vmatprep.subr.mxu0 0.0
    %665 = vmatpush1.msra.mxu0 0.0
    %666 = vmatprep.subr.mxu0 0.0
    %667 = vmatpush1.msra.mxu0 0.0
    %668 = vmatprep.subr.mxu0 0.0
    %669 = vmatpush1.msra.mxu0 0.0
    %670 = vmatprep.subr.mxu0 0.0
    %671 = vmatpush1.msra.mxu0 0.0
    %672 = vmatprep.subr.mxu0 0.0
    %673 = vmatpush1.msra.mxu0 0.0
    %674 = vmatprep.subr.mxu0 0.0
    %675 = vmatpush1.msra.mxu0 0.0
    %676 = vmatprep.subr.mxu0 0.0
    %677 = vmatpush1.msra.mxu0 0.0
    %678 = vmatprep.subr.mxu0 0.0
    %679 = vmatpush1.msra.mxu0 0.0
    %680 = vmatprep.subr.mxu0 0.0
    %681 = vmatpush1.msra.mxu0 0.0
    %682 = vmatprep.subr.mxu0 0.0
    %683 = vmatpush1.msra.mxu0 0.0
    %684 = vmatprep.subr.mxu0 0.0
    %685 = vmatpush1.msra.mxu0 0.0
    %686 = vmatprep.mubr.f32.mxu0 0.0
    %687 = vmatmul.mubr.f32.gmra.mrb[0].mxu0 %v620
    %v688 = vpop.f32.mrb[0].mxu0
    %v689 = vadd.f32 0.0, %v688
    %v690 = vpop.f32.mrb[0].mxu0
    %v691 = vadd.f32 0.0, %v690
    %692 = vdwg.mxu0
    %v695 = vrot.slane %v689, 2
    %v696 = vrot.slane %v691, 2
    %v699 = vadd.f32 %v166, %v695
    %v700 = vadd.f32 %v316, %v696
    %v701 = vxor.u32 %v699, 2147483648
    %v702 = vxor.u32 %v700, 2147483648
    %v703 = vmul.f32 %v701, 1.442695
    %v704 = vpow.pop %v703
    %v705 = vmul.f32 %v702, 1.442695
    %v706 = vpow.pop %v705
    %v707 = vadd.f32 %v704, 1.0
    %v708 = vadd.f32 %v706, 1.0
    %v709 = vrcp.pop %v707
    %v710 = vmul.f32 1.0, %v709
    %v711 = vrcp.pop %v708
    %v712 = vmul.f32 1.0, %v711
    %v713 = vtanh.pop %v699
    %v714 = vtanh.pop %v700
    %v716 = vrot.slane %v578, 6
    %v718 = vmul.f32 %v710, %v716
    %720 = vrot.lane.b32.xlu0 %v713, 64
    %v721 = vpop.permute.xlu0 %720
    %v723 = vmul.f32 %v710, %v721
    %725 = vrot.lane.b32.xlu0 %v723, 32
    %v726 = vpop.permute.xlu0 %725
    %v728 = vadd.f32 %v718, %v726
    %v729 = vtanh.pop %v728
    %731 = vrot.lane.b32.xlu0 %v729, 64
    %v732 = vpop.permute.xlu0 %731
    %v734 = vmul.f32 %v710, %v732
    %v736 = vrot.slane %v598, 6
    %v738 = vmul.f32 %v712, %v736
    %740 = vrot.lane.b32.xlu0 %v714, 64
    %v741 = vpop.permute.xlu0 %740
    %v743 = vmul.f32 %v712, %v741
    %745 = vrot.lane.b32.xlu0 %v743, 32
    %v746 = vpop.permute.xlu0 %745
    %v748 = vadd.f32 %v738, %v746
    %v749 = vtanh.pop %v748
    %751 = vrot.lane.b32.xlu0 %v749, 64
    %v752 = vpop.permute.xlu0 %751
    %v754 = vmul.f32 %v712, %v752
    %756 = vrot.lane.b32.xlu0 %v734, 32
    %v757 = vpop.permute.xlu0 %756
    %vm759 = vcmask 261126
    %760 = vst.msk [vmem:[#allocation2] sm:$0xc0] %vm759, %v757
    %762 = vrot.lane.b32.xlu0 %v754, 64
    %v763 = vpop.permute.xlu0 %762
    %vm765 = vcmask 523526
    %766 = vst.msk [vmem:[#allocation2 + $0x2] sm:$0xc0] %vm765, %v763
    %v768 = vrot.slane %v168, 6
    %v770 = vsel %vm92, %v757, %v763
    %v772 = vrot.slane %v770, 6
    %v773 = vsel %vm179, %v772, 0
    %775 = vmatprep.subr.mxu0 %v42
    %776 = vmatpush1.msra.mxu0 %v41
    %777 = vmatprep.subr.mxu0 %v44
    %778 = vmatpush1.msra.mxu0 %v43
    %779 = vmatprep.subr.mxu0 %v46
    %780 = vmatpush1.msra.mxu0 %v45
    %781 = vmatprep.subr.mxu0 %v48
    %782 = vmatpush1.msra.mxu0 %v47
    %783 = vmatprep.subr.mxu0 %v50
    %784 = vmatpush1.msra.mxu0 %v49
    %785 = vmatprep.subr.mxu0 %v52
    %786 = vmatpush1.msra.mxu0 %v51
    %787 = vmatprep.subr.mxu0 %v54
    %788 = vmatpush1.msra.mxu0 %v53
    %789 = vmatprep.subr.mxu0 %v56
    %790 = vmatpush1.msra.mxu0 %v55
    %791 = vmatprep.subr.mxu0 0.0
    %792 = vmatpush1.msra.mxu0 0.0
    %793 = vmatprep.subr.mxu0 0.0
    %794 = vmatpush1.msra.mxu0 0.0
    %795 = vmatprep.subr.mxu0 0.0
    %796 = vmatpush1.msra.mxu0 0.0
    %797 = vmatprep.subr.mxu0 0.0
    %798 = vmatpush1.msra.mxu0 0.0
    %799 = vmatprep.subr.mxu0 0.0
    %800 = vmatpush1.msra.mxu0 0.0
    %801 = vmatprep.subr.mxu0 0.0
    %802 = vmatpush1.msra.mxu0 0.0
    %803 = vmatprep.subr.mxu0 0.0
    %804 = vmatpush1.msra.mxu0 0.0
    %805 = vmatprep.subr.mxu0 0.0
    %806 = vmatpush1.msra.mxu0 0.0
    %807 = vmatprep.subr.mxu0 0.0
    %808 = vmatpush1.msra.mxu0 0.0
    %809 = vmatprep.subr.mxu0 0.0
    %810 = vmatpush1.msra.mxu0 0.0
    %811 = vmatprep.subr.mxu0 0.0
    %812 = vmatpush1.msra.mxu0 0.0
    %813 = vmatprep.subr.mxu0 0.0
    %814 = vmatpush1.msra.mxu0 0.0
    %815 = vmatprep.subr.mxu0 0.0
    %816 = vmatpush1.msra.mxu0 0.0
    %817 = vmatprep.subr.mxu0 0.0
    %818 = vmatpush1.msra.mxu0 0.0
    %819 = vmatprep.subr.mxu0 0.0
    %820 = vmatpush1.msra.mxu0 0.0
    %821 = vmatprep.subr.mxu0 0.0
    %822 = vmatpush1.msra.mxu0 0.0
    %823 = vmatprep.subr.mxu0 0.0
    %824 = vmatpush1.msra.mxu0 0.0
    %825 = vmatprep.subr.mxu0 0.0
    %826 = vmatpush1.msra.mxu0 0.0
    %827 = vmatprep.subr.mxu0 0.0
    %828 = vmatpush1.msra.mxu0 0.0
    %829 = vmatprep.subr.mxu0 0.0
    %830 = vmatpush1.msra.mxu0 0.0
    %831 = vmatprep.subr.mxu0 0.0
    %832 = vmatpush1.msra.mxu0 0.0
    %833 = vmatprep.subr.mxu0 0.0
    %834 = vmatpush1.msra.mxu0 0.0
    %835 = vmatprep.subr.mxu0 0.0
    %836 = vmatpush1.msra.mxu0 0.0
    %837 = vmatprep.subr.mxu0 0.0
    %838 = vmatpush1.msra.mxu0 0.0
    %839 = vmatprep.mubr.f32.mxu0 0.0
    %840 = vmatmul.mubr.f32.gmra.mrb[0].mxu0 %v773
    %v841 = vpop.f32.mrb[0].mxu0
    %v842 = vadd.f32 0.0, %v841
    %v843 = vpop.f32.mrb[0].mxu0
    %v844 = vadd.f32 0.0, %v843
    %845 = vdwg.mxu0
    %v846 = vadd.f32 %v172, %v842
    %v847 = vadd.f32 %v768, %v844
    %v848 = vxor.u32 %v846, 2147483648
    %v849 = vxor.u32 %v847, 2147483648
    %v850 = vmul.f32 %v848, 1.442695
    %v851 = vpow.pop %v850
    %v852 = vmul.f32 %v849, 1.442695
    %v853 = vpow.pop %v852
    %v854 = vadd.f32 %v851, 1.0
    %v855 = vadd.f32 %v853, 1.0
    %v856 = vrcp.pop %v854
    %v857 = vmul.f32 1.0, %v856
    %v858 = vrcp.pop %v855
    %v859 = vmul.f32 1.0, %v858
    %v860 = vtanh.pop %v846
    %v861 = vtanh.pop %v847
    %v863 = vrot.slane %v728, 6
    %v865 = vmul.f32 %v857, %v863
    %867 = vrot.lane.b32.xlu0 %v860, 64
    %v868 = vpop.permute.xlu0 %867
    %v870 = vmul.f32 %v857, %v868
    %872 = vrot.lane.b32.xlu0 %v870, 32
    %v873 = vpop.permute.xlu0 %872
    %v875 = vadd.f32 %v865, %v873
    %v876 = vtanh.pop %v875
    %878 = vrot.lane.b32.xlu0 %v876, 64
    %v879 = vpop.permute.xlu0 %878
    %v881 = vmul.f32 %v857, %v879
    %v883 = vrot.slane %v748, 6
    %v885 = vmul.f32 %v859, %v883
    %887 = vrot.lane.b32.xlu0 %v861, 64
    %v888 = vpop.permute.xlu0 %887
    %v890 = vmul.f32 %v859, %v888
    %892 = vrot.lane.b32.xlu0 %v890, 32
    %v893 = vpop.permute.xlu0 %892
    %v895 = vadd.f32 %v885, %v893
    %v896 = vtanh.pop %v895
    %898 = vrot.lane.b32.xlu0 %v896, 64
    %v899 = vpop.permute.xlu0 %898
    %v901 = vmul.f32 %v859, %v899
    %903 = vrot.lane.b32.xlu0 %v881, 32
    %v904 = vpop.permute.xlu0 %903
    %906 = vst.msk [vmem:[#allocation2 + $0x8] sm:$0x3] %vm308, %v904
    %908 = vrot.lane.b32.xlu0 %v901, 64
    %v909 = vpop.permute.xlu0 %908
    %911 = vst.msk [vmem:[#allocation2 + $0x6] sm:$0x3] %vm314, %v909
    %v912 = vrot.slane %v168, 2
    %v914 = vsel %vm92, %v904, %v909
    %v916 = vsel %vm179, %v914, 0
    %918 = vmatprep.subr.mxu0 %v42
    %919 = vmatpush1.msra.mxu0 %v41
    %920 = vmatprep.subr.mxu0 %v44
    %921 = vmatpush1.msra.mxu0 %v43
    %922 = vmatprep.subr.mxu0 %v46
    %923 = vmatpush1.msra.mxu0 %v45
    %924 = vmatprep.subr.mxu0 %v48
    %925 = vmatpush1.msra.mxu0 %v47
    %926 = vmatprep.subr.mxu0 %v50
    %927 = vmatpush1.msra.mxu0 %v49
    %928 = vmatprep.subr.mxu0 %v52
    %929 = vmatpush1.msra.mxu0 %v51
    %930 = vmatprep.subr.mxu0 %v54
    %931 = vmatpush1.msra.mxu0 %v53
    %932 = vmatprep.subr.mxu0 %v56
    %933 = vmatpush1.msra.mxu0 %v55
    %934 = vmatprep.subr.mxu0 0.0
    %935 = vmatpush1.msra.mxu0 0.0
    %936 = vmatprep.subr.mxu0 0.0
    %937 = vmatpush1.msra.mxu0 0.0
    %938 = vmatprep.subr.mxu0 0.0
    %939 = vmatpush1.msra.mxu0 0.0
    %940 = vmatprep.subr.mxu0 0.0
    %941 = vmatpush1.msra.mxu0 0.0
    %942 = vmatprep.subr.mxu0 0.0
    %943 = vmatpush1.msra.mxu0 0.0
    %944 = vmatprep.subr.mxu0 0.0
    %945 = vmatpush1.msra.mxu0 0.0
    %946 = vmatprep.subr.mxu0 0.0
    %947 = vmatpush1.msra.mxu0 0.0
    %948 = vmatprep.subr.mxu0 0.0
    %949 = vmatpush1.msra.mxu0 0.0
    %950 = vmatprep.subr.mxu0 0.0
    %951 = vmatpush1.msra.mxu0 0.0
    %952 = vmatprep.subr.mxu0 0.0
    %953 = vmatpush1.msra.mxu0 0.0
    %954 = vmatprep.subr.mxu0 0.0
    %955 = vmatpush1.msra.mxu0 0.0
    %956 = vmatprep.subr.mxu0 0.0
    %957 = vmatpush1.msra.mxu0 0.0
    %958 = vmatprep.subr.mxu0 0.0
    %959 = vmatpush1.msra.mxu0 0.0
    %960 = vmatprep.subr.mxu0 0.0
    %961 = vmatpush1.msra.mxu0 0.0
    %962 = vmatprep.subr.mxu0 0.0
    %963 = vmatpush1.msra.mxu0 0.0
    %964 = vmatprep.subr.mxu0 0.0
    %965 = vmatpush1.msra.mxu0 0.0
    %966 = vmatprep.subr.mxu0 0.0
    %967 = vmatpush1.msra.mxu0 0.0
    %968 = vmatprep.subr.mxu0 0.0
    %969 = vmatpush1.msra.mxu0 0.0
    %970 = vmatprep.subr.mxu0 0.0
    %971 = vmatpush1.msra.mxu0 0.0
    %972 = vmatprep.subr.mxu0 0.0
    %973 = vmatpush1.msra.mxu0 0.0
    %974 = vmatprep.subr.mxu0 0.0
    %975 = vmatpush1.msra.mxu0 0.0
    %976 = vmatprep.subr.mxu0 0.0
    %977 = vmatpush1.msra.mxu0 0.0
    %978 = vmatprep.subr.mxu0 0.0
    %979 = vmatpush1.msra.mxu0 0.0
    %980 = vmatprep.subr.mxu0 0.0
    %981 = vmatpush1.msra.mxu0 0.0
    %982 = vmatprep.mubr.f32.mxu0 0.0
    %983 = vmatmul.mubr.f32.gmra.mrb[0].mxu0 %v916
    %v984 = vpop.f32.mrb[0].mxu0
    %v985 = vadd.f32 0.0, %v984
    %v986 = vpop.f32.mrb[0].mxu0
    %v987 = vadd.f32 0.0, %v986
    %988 = vdwg.mxu0
    %v991 = vrot.slane %v985, 6
    %v992 = vrot.slane %v987, 6
    %v995 = vadd.f32 %v172, %v991
    %v996 = vadd.f32 %v912, %v992
    %v997 = vxor.u32 %v995, 2147483648
    %v998 = vxor.u32 %v996, 2147483648
    %v999 = vmul.f32 %v997, 1.442695
    %v1000 = vpow.pop %v999
    %v1001 = vmul.f32 %v998, 1.442695
    %v1002 = vpow.pop %v1001
    %v1003 = vadd.f32 %v1000, 1.0
    %v1004 = vadd.f32 %v1002, 1.0
    %v1005 = vrcp.pop %v1003
    %v1006 = vmul.f32 1.0, %v1005
    %v1007 = vrcp.pop %v1004
    %v1008 = vmul.f32 1.0, %v1007
    %v1009 = vtanh.pop %v995
    %v1010 = vtanh.pop %v996
    %v1012 = vrot.slane %v875, 6
    %v1014 = vmul.f32 %v1006, %v1012
    %1016 = vrot.lane.b32.xlu0 %v1009, 64
    %v1017 = vpop.permute.xlu0 %1016
    %v1019 = vmul.f32 %v1006, %v1017
    %1021 = vrot.lane.b32.xlu0 %v1019, 32
    %v1022 = vpop.permute.xlu0 %1021
    %v1024 = vadd.f32 %v1014, %v1022
    %v1025 = vtanh.pop %v1024
    %1027 = vrot.lane.b32.xlu0 %v1025, 64
    %v1028 = vpop.permute.xlu0 %1027
    %v1030 = vmul.f32 %v1006, %v1028
    %v1032 = vrot.slane %v895, 6
    %v1034 = vmul.f32 %v1008, %v1032
    %1036 = vrot.lane.b32.xlu0 %v1010, 64
    %v1037 = vpop.permute.xlu0 %1036
    %v1039 = vmul.f32 %v1008, %v1037
    %1041 = vrot.lane.b32.xlu0 %v1039, 32
    %v1042 = vpop.permute.xlu0 %1041
    %v1044 = vadd.f32 %v1034, %v1042
    %v1045 = vtanh.pop %v1044
    %1047 = vrot.lane.b32.xlu0 %v1045, 64
    %v1048 = vpop.permute.xlu0 %1047
    %v1050 = vmul.f32 %v1008, %v1048
    %1052 = vrot.lane.b32.xlu0 %v1030, 32
    %v1053 = vpop.permute.xlu0 %1052
    %1055 = vst.msk [vmem:[#allocation2 + $0x8] sm:$0xc] %vm459, %v1053
    %1057 = vrot.lane.b32.xlu0 %v1050, 64
    %v1058 = vpop.permute.xlu0 %1057
    %1060 = vst.msk [vmem:[#allocation2 + $0x2] sm:$0xc] %vm465, %v1058
    %v1061 = vsel %vm92, %v1053, %v1058
    %v1063 = vrot.slane %v1061, 2
    %v1064 = vsel %vm179, %v1063, 0
    %1066 = vmatprep.subr.mxu0 %v42
    %1067 = vmatpush1.msra.mxu0 %v41
    %1068 = vmatprep.subr.mxu0 %v44
    %1069 = vmatpush1.msra.mxu0 %v43
    %1070 = vmatprep.subr.mxu0 %v46
    %1071 = vmatpush1.msra.mxu0 %v45
    %1072 = vmatprep.subr.mxu0 %v48
    %1073 = vmatpush1.msra.mxu0 %v47
    %1074 = vmatprep.subr.mxu0 %v50
    %1075 = vmatpush1.msra.mxu0 %v49
    %1076 = vmatprep.subr.mxu0 %v52
    %1077 = vmatpush1.msra.mxu0 %v51
    %1078 = vmatprep.subr.mxu0 %v54
    %1079 = vmatpush1.msra.mxu0 %v53
    %1080 = vmatprep.subr.mxu0 %v56
    %1081 = vmatpush1.msra.mxu0 %v55
    %1082 = vmatprep.subr.mxu0 0.0
    %1083 = vmatpush1.msra.mxu0 0.0
    %1084 = vmatprep.subr.mxu0 0.0
    %1085 = vmatpush1.msra.mxu0 0.0
    %1086 = vmatprep.subr.mxu0 0.0
    %1087 = vmatpush1.msra.mxu0 0.0
    %1088 = vmatprep.subr.mxu0 0.0
    %1089 = vmatpush1.msra.mxu0 0.0
    %1090 = vmatprep.subr.mxu0 0.0
    %1091 = vmatpush1.msra.mxu0 0.0
    %1092 = vmatprep.subr.mxu0 0.0
    %1093 = vmatpush1.msra.mxu0 0.0
    %1094 = vmatprep.subr.mxu0 0.0
    %1095 = vmatpush1.msra.mxu0 0.0
    %1096 = vmatprep.subr.mxu0 0.0
    %1097 = vmatpush1.msra.mxu0 0.0
    %1098 = vmatprep.subr.mxu0 0.0
    %1099 = vmatpush1.msra.mxu0 0.0
    %1100 = vmatprep.subr.mxu0 0.0
    %1101 = vmatpush1.msra.mxu0 0.0
    %1102 = vmatprep.subr.mxu0 0.0
    %1103 = vmatpush1.msra.mxu0 0.0
    %1104 = vmatprep.subr.mxu0 0.0
    %1105 = vmatpush1.msra.mxu0 0.0
    %1106 = vmatprep.subr.mxu0 0.0
    %1107 = vmatpush1.msra.mxu0 0.0
    %1108 = vmatprep.subr.mxu0 0.0
    %1109 = vmatpush1.msra.mxu0 0.0
    %1110 = vmatprep.subr.mxu0 0.0
    %1111 = vmatpush1.msra.mxu0 0.0
    %1112 = vmatprep.subr.mxu0 0.0
    %1113 = vmatpush1.msra.mxu0 0.0
    %1114 = vmatprep.subr.mxu0 0.0
    %1115 = vmatpush1.msra.mxu0 0.0
    %1116 = vmatprep.subr.mxu0 0.0
    %1117 = vmatpush1.msra.mxu0 0.0
    %1118 = vmatprep.subr.mxu0 0.0
    %1119 = vmatpush1.msra.mxu0 0.0
    %1120 = vmatprep.subr.mxu0 0.0
    %1121 = vmatpush1.msra.mxu0 0.0
    %1122 = vmatprep.subr.mxu0 0.0
    %1123 = vmatpush1.msra.mxu0 0.0
    %1124 = vmatprep.subr.mxu0 0.0
    %1125 = vmatpush1.msra.mxu0 0.0
    %1126 = vmatprep.subr.mxu0 0.0
    %1127 = vmatpush1.msra.mxu0 0.0
    %1128 = vmatprep.subr.mxu0 0.0
    %1129 = vmatpush1.msra.mxu0 0.0
    %1130 = vmatprep.mubr.f32.mxu0 0.0
    %1131 = vmatmul.mubr.f32.gmra.mrb[0].mxu0 %v1064
    %v1132 = vpop.f32.mrb[0].mxu0
    %v1133 = vadd.f32 0.0, %v1132
    %v1134 = vpop.f32.mrb[0].mxu0
    %v1135 = vadd.f32 0.0, %v1134
    %1136 = vdwg.mxu0
    %v1139 = vrot.slane %v1133, 4
    %v1140 = vrot.slane %v1135, 4
    %v1143 = vadd.f32 %v172, %v1139
    %v1144 = vadd.f32 %v768, %v1140
    %v1145 = vxor.u32 %v1143, 2147483648
    %v1146 = vxor.u32 %v1144, 2147483648
    %v1147 = vmul.f32 %v1145, 1.442695
    %v1148 = vpow.pop %v1147
    %v1149 = vmul.f32 %v1146, 1.442695
    %v1150 = vpow.pop %v1149
    %v1151 = vadd.f32 %v1148, 1.0
    %v1152 = vadd.f32 %v1150, 1.0
    %v1153 = vrcp.pop %v1151
    %v1154 = vmul.f32 1.0, %v1153
    %v1155 = vrcp.pop %v1152
    %v1156 = vmul.f32 1.0, %v1155
    %v1157 = vtanh.pop %v1143
    %v1158 = vtanh.pop %v1144
    %v1160 = vrot.slane %v1024, 6
    %v1162 = vmul.f32 %v1154, %v1160
    %1164 = vrot.lane.b32.xlu0 %v1157, 64
    %v1165 = vpop.permute.xlu0 %1164
    %v1167 = vmul.f32 %v1154, %v1165
    %1169 = vrot.lane.b32.xlu0 %v1167, 32
    %v1170 = vpop.permute.xlu0 %1169
    %v1172 = vadd.f32 %v1162, %v1170
    %v1173 = vtanh.pop %v1172
    %1175 = vrot.lane.b32.xlu0 %v1173, 64
    %v1176 = vpop.permute.xlu0 %1175
    %v1178 = vmul.f32 %v1154, %v1176
    %v1180 = vrot.slane %v1044, 6
    %v1182 = vmul.f32 %v1156, %v1180
    %1184 = vrot.lane.b32.xlu0 %v1158, 64
    %v1185 = vpop.permute.xlu0 %1184
    %v1187 = vmul.f32 %v1156, %v1185
    %1189 = vrot.lane.b32.xlu0 %v1187, 32
    %v1190 = vpop.permute.xlu0 %1189
    %v1192 = vadd.f32 %v1182, %v1190
    %v1193 = vtanh.pop %v1192
    %1195 = vrot.lane.b32.xlu0 %v1193, 64
    %v1196 = vpop.permute.xlu0 %1195
    %v1198 = vmul.f32 %v1156, %v1196
    %1200 = vrot.lane.b32.xlu0 %v1178, 32
    %v1201 = vpop.permute.xlu0 %1200
    %1203 = vst.msk [vmem:[#allocation2 + $0x8] sm:$0x30] %vm609, %v1201
    %1205 = vrot.lane.b32.xlu0 %v1198, 64
    %v1206 = vpop.permute.xlu0 %1205
    %1208 = vst.msk [vmem:[#allocation2 - $0x2] sm:$0x30] %vm615, %v1206
    %v1209 = vsel %vm92, %v1201, %v1206
    %v1211 = vrot.slane %v1209, 4
    %v1212 = vsel %vm179, %v1211, 0
    %1214 = vmatprep.subr.mxu0 %v42
    %1215 = vmatpush1.msra.mxu0 %v41
    %1216 = vmatprep.subr.mxu0 %v44
    %1217 = vmatpush1.msra.mxu0 %v43
    %1218 = vmatprep.subr.mxu0 %v46
    %1219 = vmatpush1.msra.mxu0 %v45
    %1220 = vmatprep.subr.mxu0 %v48
    %1221 = vmatpush1.msra.mxu0 %v47
    %1222 = vmatprep.subr.mxu0 %v50
    %1223 = vmatpush1.msra.mxu0 %v49
    %1224 = vmatprep.subr.mxu0 %v52
    %1225 = vmatpush1.msra.mxu0 %v51
    %1226 = vmatprep.subr.mxu0 %v54
    %1227 = vmatpush1.msra.mxu0 %v53
    %1228 = vmatprep.subr.mxu0 %v56
    %1229 = vmatpush1.msra.mxu0 %v55
    %1230 = vmatprep.subr.mxu0 0.0
    %1231 = vmatpush1.msra.mxu0 0.0
    %1232 = vmatprep.subr.mxu0 0.0
    %1233 = vmatpush1.msra.mxu0 0.0
    %1234 = vmatprep.subr.mxu0 0.0
    %1235 = vmatpush1.msra.mxu0 0.0
    %1236 = vmatprep.subr.mxu0 0.0
    %1237 = vmatpush1.msra.mxu0 0.0
    %1238 = vmatprep.subr.mxu0 0.0
    %1239 = vmatpush1.msra.mxu0 0.0
    %1240 = vmatprep.subr.mxu0 0.0
    %1241 = vmatpush1.msra.mxu0 0.0
    %1242 = vmatprep.subr.mxu0 0.0
    %1243 = vmatpush1.msra.mxu0 0.0
    %1244 = vmatprep.subr.mxu0 0.0
    %1245 = vmatpush1.msra.mxu0 0.0
    %1246 = vmatprep.subr.mxu0 0.0
    %1247 = vmatpush1.msra.mxu0 0.0
    %1248 = vmatprep.subr.mxu0 0.0
    %1249 = vmatpush1.msra.mxu0 0.0
    %1250 = vmatprep.subr.mxu0 0.0
    %1251 = vmatpush1.msra.mxu0 0.0
    %1252 = vmatprep.subr.mxu0 0.0
    %1253 = vmatpush1.msra.mxu0 0.0
    %1254 = vmatprep.subr.mxu0 0.0
    %1255 = vmatpush1.msra.mxu0 0.0
    %1256 = vmatprep.subr.mxu0 0.0
    %1257 = vmatpush1.msra.mxu0 0.0
    %1258 = vmatprep.subr.mxu0 0.0
    %1259 = vmatpush1.msra.mxu0 0.0
    %1260 = vmatprep.subr.mxu0 0.0
    %1261 = vmatpush1.msra.mxu0 0.0
    %1262 = vmatprep.subr.mxu0 0.0
    %1263 = vmatpush1.msra.mxu0 0.0
    %1264 = vmatprep.subr.mxu0 0.0
    %1265 = vmatpush1.msra.mxu0 0.0
    %1266 = vmatprep.subr.mxu0 0.0
    %1267 = vmatpush1.msra.mxu0 0.0
    %1268 = vmatprep.subr.mxu0 0.0
    %1269 = vmatpush1.msra.mxu0 0.0
    %1270 = vmatprep.subr.mxu0 0.0
    %1271 = vmatpush1.msra.mxu0 0.0
    %1272 = vmatprep.subr.mxu0 0.0
    %1273 = vmatpush1.msra.mxu0 0.0
    %1274 = vmatprep.subr.mxu0 0.0
    %1275 = vmatpush1.msra.mxu0 0.0
    %1276 = vmatprep.subr.mxu0 0.0
    %1277 = vmatpush1.msra.mxu0 0.0
    %1278 = vmatprep.mubr.f32.mxu0 0.0
    %1279 = vmatmul.mubr.f32.gmra.mrb[0].mxu0 %v1212
    %v1280 = vpop.f32.mrb[0].mxu0
    %v1281 = vadd.f32 0.0, %v1280
    %v1282 = vpop.f32.mrb[0].mxu0
    %v1283 = vadd.f32 0.0, %v1282
    %1284 = vdwg.mxu0
    %v1287 = vrot.slane %v1281, 2
    %v1288 = vrot.slane %v1283, 2
    %v1291 = vadd.f32 %v172, %v1287
    %v1292 = vadd.f32 %v912, %v1288
    %v1293 = vxor.u32 %v1291, 2147483648
    %v1294 = vxor.u32 %v1292, 2147483648
    %v1295 = vmul.f32 %v1293, 1.442695
    %v1296 = vpow.pop %v1295
    %v1297 = vmul.f32 %v1294, 1.442695
    %v1298 = vpow.pop %v1297
    %v1299 = vadd.f32 %v1296, 1.0
    %v1300 = vadd.f32 %v1298, 1.0
    %v1301 = vrcp.pop %v1299
    %v1302 = vmul.f32 1.0, %v1301
    %v1303 = vrcp.pop %v1300
    %v1304 = vmul.f32 1.0, %v1303
    %v1305 = vtanh.pop %v1291
    %v1306 = vtanh.pop %v1292
    %v1308 = vrot.slane %v1172, 6
    %v1310 = vmul.f32 %v1302, %v1308
    %1312 = vrot.lane.b32.xlu0 %v1305, 64
    %v1313 = vpop.permute.xlu0 %1312
    %v1315 = vmul.f32 %v1302, %v1313
    %1317 = vrot.lane.b32.xlu0 %v1315, 32
    %v1318 = vpop.permute.xlu0 %1317
    %v1320 = vadd.f32 %v1310, %v1318
    %v1321 = vtanh.pop %v1320
    %1323 = vrot.lane.b32.xlu0 %v1321, 64
    %v1324 = vpop.permute.xlu0 %1323
    %v1326 = vmul.f32 %v1302, %v1324
    %v1328 = vrot.slane %v1192, 6
    %v1330 = vmul.f32 %v1304, %v1328
    %1332 = vrot.lane.b32.xlu0 %v1306, 64
    %v1333 = vpop.permute.xlu0 %1332
    %v1335 = vmul.f32 %v1304, %v1333
    %1337 = vrot.lane.b32.xlu0 %v1335, 32
    %v1338 = vpop.permute.xlu0 %1337
    %v1340 = vadd.f32 %v1330, %v1338
    %v1341 = vtanh.pop %v1340
    %1343 = vrot.lane.b32.xlu0 %v1341, 64
    %v1344 = vpop.permute.xlu0 %1343
    %v1346 = vmul.f32 %v1304, %v1344
    %1348 = vrot.lane.b32.xlu0 %v1326, 32
    %v1349 = vpop.permute.xlu0 %1348
    %1351 = vst.msk [vmem:[#allocation2 + $0x8] sm:$0xc0] %vm759, %v1349
    %1353 = vrot.lane.b32.xlu0 %v1346, 64
    %v1354 = vpop.permute.xlu0 %1353
    %1356 = vst.msk [vmem:[#allocation2 - $0x6] sm:$0xc0] %vm765, %v1354
    %v1357 = vld [vmem:[#allocation2] sm:$0xff]
    %v1358 = vld [vmem:[#allocation2 + $0x8] sm:$0xff]
    %v1360 = vlaneseq
    %v1361 = vshrl.u32 %v1360, 7
    %v1362 = vsub.s32 0, %v1361
    %v1363 = vrot.slane %v78, %v1362
    %v1364 = vlaneseq
    %v1365 = vshrl.u32 %v1364, 7
    %v1366 = vsub.s32 1, %v1365
    %v1367 = vrot.slane %v78, %v1366
    %v1371 = vsel %vm179, %v1357, 0
    %v1374 = vsel %vm179, %v1358, 0
    %1376 = vmatprep.subr.mxu0 %v59
    %1377 = vmatpush1.msra.mxu0 %v58
    %1378 = vmatprep.subr.mxu0 %v61
    %1379 = vmatpush1.msra.mxu0 %v60
    %1380 = vmatprep.subr.mxu0 %v63
    %1381 = vmatpush1.msra.mxu0 %v62
    %1382 = vmatprep.subr.mxu0 %v65
    %1383 = vmatpush1.msra.mxu0 %v64
    %1384 = vmatprep.subr.mxu0 %v67
    %1385 = vmatpush1.msra.mxu0 %v66
    %1386 = vmatprep.subr.mxu0 %v69
    %1387 = vmatpush1.msra.mxu0 %v68
    %1388 = vmatprep.subr.mxu0 %v71
    %1389 = vmatpush1.msra.mxu0 %v70
    %1390 = vmatprep.subr.mxu0 %v73
    %1391 = vmatpush1.msra.mxu0 %v72
    %1392 = vmatprep.subr.mxu0 0.0
    %1393 = vmatpush1.msra.mxu0 0.0
    %1394 = vmatprep.subr.mxu0 0.0
    %1395 = vmatpush1.msra.mxu0 0.0
    %1396 = vmatprep.subr.mxu0 0.0
    %1397 = vmatpush1.msra.mxu0 0.0
    %1398 = vmatprep.subr.mxu0 0.0
    %1399 = vmatpush1.msra.mxu0 0.0
    %1400 = vmatprep.subr.mxu0 0.0
    %1401 = vmatpush1.msra.mxu0 0.0
    %1402 = vmatprep.subr.mxu0 0.0
    %1403 = vmatpush1.msra.mxu0 0.0
    %1404 = vmatprep.subr.mxu0 0.0
    %1405 = vmatpush1.msra.mxu0 0.0
    %1406 = vmatprep.subr.mxu0 0.0
    %1407 = vmatpush1.msra.mxu0 0.0
    %1408 = vmatprep.subr.mxu0 0.0
    %1409 = vmatpush1.msra.mxu0 0.0
    %1410 = vmatprep.subr.mxu0 0.0
    %1411 = vmatpush1.msra.mxu0 0.0
    %1412 = vmatprep.subr.mxu0 0.0
    %1413 = vmatpush1.msra.mxu0 0.0
    %1414 = vmatprep.subr.mxu0 0.0
    %1415 = vmatpush1.msra.mxu0 0.0
    %1416 = vmatprep.subr.mxu0 0.0
    %1417 = vmatpush1.msra.mxu0 0.0
    %1418 = vmatprep.subr.mxu0 0.0
    %1419 = vmatpush1.msra.mxu0 0.0
    %1420 = vmatprep.subr.mxu0 0.0
    %1421 = vmatpush1.msra.mxu0 0.0
    %1422 = vmatprep.subr.mxu0 0.0
    %1423 = vmatpush1.msra.mxu0 0.0
    %1424 = vmatprep.subr.mxu0 0.0
    %1425 = vmatpush1.msra.mxu0 0.0
    %1426 = vmatprep.subr.mxu0 0.0
    %1427 = vmatpush1.msra.mxu0 0.0
    %1428 = vmatprep.subr.mxu0 0.0
    %1429 = vmatpush1.msra.mxu0 0.0
    %1430 = vmatprep.subr.mxu0 0.0
    %1431 = vmatpush1.msra.mxu0 0.0
    %1432 = vmatprep.subr.mxu0 0.0
    %1433 = vmatpush1.msra.mxu0 0.0
    %1434 = vmatprep.subr.mxu0 0.0
    %1435 = vmatpush1.msra.mxu0 0.0
    %1436 = vmatprep.subr.mxu0 0.0
    %1437 = vmatpush1.msra.mxu0 0.0
    %1438 = vmatprep.subr.mxu0 0.0
    %1439 = vmatpush1.msra.mxu0 0.0
    %1440 = vmatprep.mubr.f32.mxu0 0.0
    %1441 = vmatmul.mubr.f32.gmra.mrb[0].mxu0 %v1371
    %v1442 = vpop.f32.mrb[0].mxu0
    %v1443 = vadd.f32 %v1363, %v1442
    %v1444 = vpop.f32.mrb[0].mxu0
    %1445 = vmatprep.mubr.f32.mxu0 0.0
    %1446 = vmatmul.mubr.f32.gmra.mrb[0].mxu0 %v1374
    %v1447 = vpop.f32.mrb[0].mxu0
    %v1448 = vadd.f32 %v1363, %v1447
    %v1449 = vpop.f32.mrb[0].mxu0
    %v1450 = vadd.f32 %v1367, %v1449
    %1451 = vdwg.mxu0
    %v1452 = vsel %vm92, 0.0, 0
    %1454 = vmatprep.subr.mxu0 0.0
    %1455 = vmatpush1.msra.mxu0 %v74
    %1456 = vmatprep.subr.mxu0 0.0
    %1457 = vmatpush1.msra.mxu0 %v75
    %1458 = vmatprep.subr.mxu0 0.0
    %1459 = vmatpush1.msra.mxu0 %v76
    %1460 = vmatprep.subr.mxu0 0.0
    %1461 = vmatpush1.msra.mxu0 %v77
    %1462 = vmatprep.subr.mxu0 0.0
    %1463 = vmatpush1.msra.mxu0 0.0
    %1464 = vmatprep.subr.mxu0 0.0
    %1465 = vmatpush1.msra.mxu0 0.0
    %1466 = vmatprep.subr.mxu0 0.0
    %1467 = vmatpush1.msra.mxu0 0.0
    %1468 = vmatprep.subr.mxu0 0.0
    %1469 = vmatpush1.msra.mxu0 0.0
    %1470 = vmatprep.subr.mxu0 0.0
    %1471 = vmatpush1.msra.mxu0 0.0
    %1472 = vmatprep.subr.mxu0 0.0
    %1473 = vmatpush1.msra.mxu0 0.0
    %1474 = vmatprep.subr.mxu0 0.0
    %1475 = vmatpush1.msra.mxu0 0.0
    %1476 = vmatprep.subr.mxu0 0.0
    %1477 = vmatpush1.msra.mxu0 0.0
    %1478 = vmatprep.subr.mxu0 0.0
    %1479 = vmatpush1.msra.mxu0 0.0
    %1480 = vmatprep.subr.mxu0 0.0
    %1481 = vmatpush1.msra.mxu0 0.0
    %1482 = vmatprep.subr.mxu0 0.0
    %1483 = vmatpush1.msra.mxu0 0.0
    %1484 = vmatprep.subr.mxu0 0.0
    %1485 = vmatpush1.msra.mxu0 0.0
    %1486 = vmatprep.subr.mxu0 0.0
    %1487 = vmatpush1.msra.mxu0 0.0
    %1488 = vmatprep.subr.mxu0 0.0
    %1489 = vmatpush1.msra.mxu0 0.0
    %1490 = vmatprep.subr.mxu0 0.0
    %1491 = vmatpush1.msra.mxu0 0.0
    %1492 = vmatprep.subr.mxu0 0.0
    %1493 = vmatpush1.msra.mxu0 0.0
    %1494 = vmatprep.subr.mxu0 0.0
    %1495 = vmatpush1.msra.mxu0 0.0
    %1496 = vmatprep.subr.mxu0 0.0
    %1497 = vmatpush1.msra.mxu0 0.0
    %1498 = vmatprep.subr.mxu0 0.0
    %1499 = vmatpush1.msra.mxu0 0.0
    %1500 = vmatprep.subr.mxu0 0.0
    %1501 = vmatpush1.msra.mxu0 0.0
    %1502 = vmatprep.subr.mxu0 0.0
    %1503 = vmatpush1.msra.mxu0 0.0
    %1504 = vmatprep.subr.mxu0 0.0
    %1505 = vmatpush1.msra.mxu0 0.0
    %1506 = vmatprep.subr.mxu0 0.0
    %1507 = vmatpush1.msra.mxu0 0.0
    %1508 = vmatprep.subr.mxu0 0.0
    %1509 = vmatpush1.msra.mxu0 0.0
    %1510 = vmatprep.subr.mxu0 0.0
    %1511 = vmatpush1.msra.mxu0 0.0
    %1512 = vmatprep.subr.mxu0 0.0
    %1513 = vmatpush1.msra.mxu0 0.0
    %1514 = vmatprep.subr.mxu0 0.0
    %1515 = vmatpush1.msra.mxu0 0.0
    %1516 = vmatprep.subr.mxu0 0.0
    %1517 = vmatpush1.msra.mxu0 0.0
    %1518 = vmatprep.mubr.f32.mxu0 0.0
    %1519 = vmatmul.mubr.f32.gmra.mrb[0].mxu0 %v1452
    %v1520 = vpop.f32.mrb[0].mxu0
    %v1521 = vadd.f32 0.0, %v1520
    %v1522 = vpop.f32.mrb[0].mxu0
    %1523 = vdwg.mxu0
    %v1524 = vadd.f32 %v1443, %v1521
    %v1525 = vxor.u32 %v1524, 2147483648
    %v1526 = vmul.f32 %v1525, 1.442695
    %v1527 = vpow.pop %v1526
    %v1528 = vadd.f32 %v1527, 1.0
    %v1529 = vrcp.pop %v1528
    %v1530 = vmul.f32 1.0, %v1529
    %v1531 = vtanh.pop %v1524
    %v1532 = vmul.f32 %v1530, 0.0
    %1534 = vrot.lane.b32.xlu0 %v1531, 64
    %v1535 = vpop.permute.xlu0 %1534
    %v1537 = vmul.f32 %v1530, %v1535
    %1539 = vrot.lane.b32.xlu0 %v1537, 32
    %v1540 = vpop.permute.xlu0 %1539
    %v1542 = vadd.f32 %v1532, %v1540
    %v1543 = vtanh.pop %v1542
    %1545 = vrot.lane.b32.xlu0 %v1543, 64
    %v1546 = vpop.permute.xlu0 %1545
    %v1548 = vmul.f32 %v1530, %v1546
    %1550 = vrot.lane.b32.xlu0 %v1548, 32
    %v1551 = vpop.permute.xlu0 %1550
    %v1552 = vsel %vm92, %v1551, 0
    %1554 = vmatprep.subr.mxu0 0.0
    %1555 = vmatpush1.msra.mxu0 %v74
    %1556 = vmatprep.subr.mxu0 0.0
    %1557 = vmatpush1.msra.mxu0 %v75
    %1558 = vmatprep.subr.mxu0 0.0
    %1559 = vmatpush1.msra.mxu0 %v76
    %1560 = vmatprep.subr.mxu0 0.0
    %1561 = vmatpush1.msra.mxu0 %v77
    %1562 = vmatprep.subr.mxu0 0.0
    %1563 = vmatpush1.msra.mxu0 0.0
    %1564 = vmatprep.subr.mxu0 0.0
    %1565 = vmatpush1.msra.mxu0 0.0
    %1566 = vmatprep.subr.mxu0 0.0
    %1567 = vmatpush1.msra.mxu0 0.0
    %1568 = vmatprep.subr.mxu0 0.0
    %1569 = vmatpush1.msra.mxu0 0.0
    %1570 = vmatprep.subr.mxu0 0.0
    %1571 = vmatpush1.msra.mxu0 0.0
    %1572 = vmatprep.subr.mxu0 0.0
    %1573 = vmatpush1.msra.mxu0 0.0
    %1574 = vmatprep.subr.mxu0 0.0
    %1575 = vmatpush1.msra.mxu0 0.0
    %1576 = vmatprep.subr.mxu0 0.0
    %1577 = vmatpush1.msra.mxu0 0.0
    %1578 = vmatprep.subr.mxu0 0.0
    %1579 = vmatpush1.msra.mxu0 0.0
    %1580 = vmatprep.subr.mxu0 0.0
    %1581 = vmatpush1.msra.mxu0 0.0
    %1582 = vmatprep.subr.mxu0 0.0
    %1583 = vmatpush1.msra.mxu0 0.0
    %1584 = vmatprep.subr.mxu0 0.0
    %1585 = vmatpush1.msra.mxu0 0.0
    %1586 = vmatprep.subr.mxu0 0.0
    %1587 = vmatpush1.msra.mxu0 0.0
    %1588 = vmatprep.subr.mxu0 0.0
    %1589 = vmatpush1.msra.mxu0 0.0
    %1590 = vmatprep.subr.mxu0 0.0
    %1591 = vmatpush1.msra.mxu0 0.0
    %1592 = vmatprep.subr.mxu0 0.0
    %1593 = vmatpush1.msra.mxu0 0.0
    %1594 = vmatprep.subr.mxu0 0.0
    %1595 = vmatpush1.msra.mxu0 0.0
    %1596 = vmatprep.subr.mxu0 0.0
    %1597 = vmatpush1.msra.mxu0 0.0
    %1598 = vmatprep.subr.mxu0 0.0
    %1599 = vmatpush1.msra.mxu0 0.0
    %1600 = vmatprep.subr.mxu0 0.0
    %1601 = vmatpush1.msra.mxu0 0.0
    %1602 = vmatprep.subr.mxu0 0.0
    %1603 = vmatpush1.msra.mxu0 0.0
    %1604 = vmatprep.subr.mxu0 0.0
    %1605 = vmatpush1.msra.mxu0 0.0
    %1606 = vmatprep.subr.mxu0 0.0
    %1607 = vmatpush1.msra.mxu0 0.0
    %1608 = vmatprep.subr.mxu0 0.0
    %1609 = vmatpush1.msra.mxu0 0.0
    %1610 = vmatprep.subr.mxu0 0.0
    %1611 = vmatpush1.msra.mxu0 0.0
    %1612 = vmatprep.subr.mxu0 0.0
    %1613 = vmatpush1.msra.mxu0 0.0
    %1614 = vmatprep.subr.mxu0 0.0
    %1615 = vmatpush1.msra.mxu0 0.0
    %1616 = vmatprep.subr.mxu0 0.0
    %1617 = vmatpush1.msra.mxu0 0.0
    %1618 = vmatprep.mubr.f32.mxu0 0.0
    %1619 = vmatmul.mubr.f32.gmra.mrb[0].mxu0 %v1552
    %v1620 = vpop.f32.mrb[0].mxu0
    %v1621 = vadd.f32 0.0, %v1620
    %v1622 = vpop.f32.mrb[0].mxu0
    %1623 = vdwg.mxu0
    %v1625 = vrot.slane %v1621, 6
    %v1627 = vadd.f32 %v1443, %v1625
    %v1628 = vxor.u32 %v1627, 2147483648
    %v1629 = vmul.f32 %v1628, 1.442695
    %v1630 = vpow.pop %v1629
    %v1631 = vadd.f32 %v1630, 1.0
    %v1632 = vrcp.pop %v1631
    %v1633 = vmul.f32 1.0, %v1632
    %v1634 = vtanh.pop %v1627
    %v1636 = vrot.slane %v1542, 6
    %v1638 = vmul.f32 %v1633, %v1636
    %1640 = vrot.lane.b32.xlu0 %v1634, 64
    %v1641 = vpop.permute.xlu0 %1640
    %v1643 = vmul.f32 %v1633, %v1641
    %1645 = vrot.lane.b32.xlu0 %v1643, 32
    %v1646 = vpop.permute.xlu0 %1645
    %v1648 = vadd.f32 %v1638, %v1646
    %v1649 = vtanh.pop %v1648
    %1651 = vrot.lane.b32.xlu0 %v1649, 64
    %v1652 = vpop.permute.xlu0 %1651
    %v1654 = vmul.f32 %v1633, %v1652
    %v1656 = vrot.slane %v1654, 2
    %1657 = vrot.lane.b32.xlu0 %v1656, 32
    %v1658 = vpop.permute.xlu0 %1657
    %v1659 = vsel %vm92, %v1658, 0
    %1661 = vmatprep.subr.mxu0 0.0
    %1662 = vmatpush1.msra.mxu0 %v74
    %1663 = vmatprep.subr.mxu0 0.0
    %1664 = vmatpush1.msra.mxu0 %v75
    %1665 = vmatprep.subr.mxu0 0.0
    %1666 = vmatpush1.msra.mxu0 %v76
    %1667 = vmatprep.subr.mxu0 0.0
    %1668 = vmatpush1.msra.mxu0 %v77
    %1669 = vmatprep.subr.mxu0 0.0
    %1670 = vmatpush1.msra.mxu0 0.0
    %1671 = vmatprep.subr.mxu0 0.0
    %1672 = vmatpush1.msra.mxu0 0.0
    %1673 = vmatprep.subr.mxu0 0.0
    %1674 = vmatpush1.msra.mxu0 0.0
    %1675 = vmatprep.subr.mxu0 0.0
    %1676 = vmatpush1.msra.mxu0 0.0
    %1677 = vmatprep.subr.mxu0 0.0
    %1678 = vmatpush1.msra.mxu0 0.0
    %1679 = vmatprep.subr.mxu0 0.0
    %1680 = vmatpush1.msra.mxu0 0.0
    %1681 = vmatprep.subr.mxu0 0.0
    %1682 = vmatpush1.msra.mxu0 0.0
    %1683 = vmatprep.subr.mxu0 0.0
    %1684 = vmatpush1.msra.mxu0 0.0
    %1685 = vmatprep.subr.mxu0 0.0
    %1686 = vmatpush1.msra.mxu0 0.0
    %1687 = vmatprep.subr.mxu0 0.0
    %1688 = vmatpush1.msra.mxu0 0.0
    %1689 = vmatprep.subr.mxu0 0.0
    %1690 = vmatpush1.msra.mxu0 0.0
    %1691 = vmatprep.subr.mxu0 0.0
    %1692 = vmatpush1.msra.mxu0 0.0
    %1693 = vmatprep.subr.mxu0 0.0
    %1694 = vmatpush1.msra.mxu0 0.0
    %1695 = vmatprep.subr.mxu0 0.0
    %1696 = vmatpush1.msra.mxu0 0.0
    %1697 = vmatprep.subr.mxu0 0.0
    %1698 = vmatpush1.msra.mxu0 0.0
    %1699 = vmatprep.subr.mxu0 0.0
    %1700 = vmatpush1.msra.mxu0 0.0
    %1701 = vmatprep.subr.mxu0 0.0
    %1702 = vmatpush1.msra.mxu0 0.0
    %1703 = vmatprep.subr.mxu0 0.0
    %1704 = vmatpush1.msra.mxu0 0.0
    %1705 = vmatprep.subr.mxu0 0.0
    %1706 = vmatpush1.msra.mxu0 0.0
    %1707 = vmatprep.subr.mxu0 0.0
    %1708 = vmatpush1.msra.mxu0 0.0
    %1709 = vmatprep.subr.mxu0 0.0
    %1710 = vmatpush1.msra.mxu0 0.0
    %1711 = vmatprep.subr.mxu0 0.0
    %1712 = vmatpush1.msra.mxu0 0.0
    %1713 = vmatprep.subr.mxu0 0.0
    %1714 = vmatpush1.msra.mxu0 0.0
    %1715 = vmatprep.subr.mxu0 0.0
    %1716 = vmatpush1.msra.mxu0 0.0
    %1717 = vmatprep.subr.mxu0 0.0
    %1718 = vmatpush1.msra.mxu0 0.0
    %1719 = vmatprep.subr.mxu0 0.0
    %1720 = vmatpush1.msra.mxu0 0.0
    %1721 = vmatprep.subr.mxu0 0.0
    %1722 = vmatpush1.msra.mxu0 0.0
    %1723 = vmatprep.subr.mxu0 0.0
    %1724 = vmatpush1.msra.mxu0 0.0
    %1725 = vmatprep.mubr.f32.mxu0 0.0
    %1726 = vmatmul.mubr.f32.gmra.mrb[0].mxu0 %v1659
    %v1727 = vpop.f32.mrb[0].mxu0
    %v1728 = vadd.f32 0.0, %v1727
    %v1729 = vpop.f32.mrb[0].mxu0
    %1730 = vdwg.mxu0
    %v1732 = vrot.slane %v1728, 4
    %v1734 = vadd.f32 %v1443, %v1732
    %v1735 = vxor.u32 %v1734, 2147483648
    %v1736 = vmul.f32 %v1735, 1.442695
    %v1737 = vpow.pop %v1736
    %v1738 = vadd.f32 %v1737, 1.0
    %v1739 = vrcp.pop %v1738
    %v1740 = vmul.f32 1.0, %v1739
    %v1741 = vtanh.pop %v1734
    %v1743 = vrot.slane %v1648, 6
    %v1745 = vmul.f32 %v1740, %v1743
    %1747 = vrot.lane.b32.xlu0 %v1741, 64
    %v1748 = vpop.permute.xlu0 %1747
    %v1750 = vmul.f32 %v1740, %v1748
    %1752 = vrot.lane.b32.xlu0 %v1750, 32
    %v1753 = vpop.permute.xlu0 %1752
    %v1755 = vadd.f32 %v1745, %v1753
    %v1756 = vtanh.pop %v1755
    %1758 = vrot.lane.b32.xlu0 %v1756, 64
    %v1759 = vpop.permute.xlu0 %1758
    %v1761 = vmul.f32 %v1740, %v1759
    %v1763 = vrot.slane %v1761, 4
    %1764 = vrot.lane.b32.xlu0 %v1763, 32
    %v1765 = vpop.permute.xlu0 %1764
    %v1766 = vsel %vm92, %v1765, 0
    %1768 = vmatprep.subr.mxu0 0.0
    %1769 = vmatpush1.msra.mxu0 %v74
    %1770 = vmatprep.subr.mxu0 0.0
    %1771 = vmatpush1.msra.mxu0 %v75
    %1772 = vmatprep.subr.mxu0 0.0
    %1773 = vmatpush1.msra.mxu0 %v76
    %1774 = vmatprep.subr.mxu0 0.0
    %1775 = vmatpush1.msra.mxu0 %v77
    %1776 = vmatprep.subr.mxu0 0.0
    %1777 = vmatpush1.msra.mxu0 0.0
    %1778 = vmatprep.subr.mxu0 0.0
    %1779 = vmatpush1.msra.mxu0 0.0
    %1780 = vmatprep.subr.mxu0 0.0
    %1781 = vmatpush1.msra.mxu0 0.0
    %1782 = vmatprep.subr.mxu0 0.0
    %1783 = vmatpush1.msra.mxu0 0.0
    %1784 = vmatprep.subr.mxu0 0.0
    %1785 = vmatpush1.msra.mxu0 0.0
    %1786 = vmatprep.subr.mxu0 0.0
    %1787 = vmatpush1.msra.mxu0 0.0
    %1788 = vmatprep.subr.mxu0 0.0
    %1789 = vmatpush1.msra.mxu0 0.0
    %1790 = vmatprep.subr.mxu0 0.0
    %1791 = vmatpush1.msra.mxu0 0.0
    %1792 = vmatprep.subr.mxu0 0.0
    %1793 = vmatpush1.msra.mxu0 0.0
    %1794 = vmatprep.subr.mxu0 0.0
    %1795 = vmatpush1.msra.mxu0 0.0
    %1796 = vmatprep.subr.mxu0 0.0
    %1797 = vmatpush1.msra.mxu0 0.0
    %1798 = vmatprep.subr.mxu0 0.0
    %1799 = vmatpush1.msra.mxu0 0.0
    %1800 = vmatprep.subr.mxu0 0.0
    %1801 = vmatpush1.msra.mxu0 0.0
    %1802 = vmatprep.subr.mxu0 0.0
    %1803 = vmatpush1.msra.mxu0 0.0
    %1804 = vmatprep.subr.mxu0 0.0
    %1805 = vmatpush1.msra.mxu0 0.0
    %1806 = vmatprep.subr.mxu0 0.0
    %1807 = vmatpush1.msra.mxu0 0.0
    %1808 = vmatprep.subr.mxu0 0.0
    %1809 = vmatpush1.msra.mxu0 0.0
    %1810 = vmatprep.subr.mxu0 0.0
    %1811 = vmatpush1.msra.mxu0 0.0
    %1812 = vmatprep.subr.mxu0 0.0
    %1813 = vmatpush1.msra.mxu0 0.0
    %1814 = vmatprep.subr.mxu0 0.0
    %1815 = vmatpush1.msra.mxu0 0.0
    %1816 = vmatprep.subr.mxu0 0.0
    %1817 = vmatpush1.msra.mxu0 0.0
    %1818 = vmatprep.subr.mxu0 0.0
    %1819 = vmatpush1.msra.mxu0 0.0
    %1820 = vmatprep.subr.mxu0 0.0
    %1821 = vmatpush1.msra.mxu0 0.0
    %1822 = vmatprep.subr.mxu0 0.0
    %1823 = vmatpush1.msra.mxu0 0.0
    %1824 = vmatprep.subr.mxu0 0.0
    %1825 = vmatpush1.msra.mxu0 0.0
    %1826 = vmatprep.subr.mxu0 0.0
    %1827 = vmatpush1.msra.mxu0 0.0
    %1828 = vmatprep.subr.mxu0 0.0
    %1829 = vmatpush1.msra.mxu0 0.0
    %1830 = vmatprep.subr.mxu0 0.0
    %1831 = vmatpush1.msra.mxu0 0.0
    %1832 = vmatprep.mubr.f32.mxu0 0.0
    %1833 = vmatmul.mubr.f32.gmra.mrb[0].mxu0 %v1766
    %v1834 = vpop.f32.mrb[0].mxu0
    %v1835 = vadd.f32 0.0, %v1834
    %v1836 = vpop.f32.mrb[0].mxu0
    %1837 = vdwg.mxu0
    %v1839 = vrot.slane %v1835, 2
    %v1841 = vadd.f32 %v1443, %v1839
    %v1842 = vxor.u32 %v1841, 2147483648
    %v1843 = vmul.f32 %v1842, 1.442695
    %v1844 = vpow.pop %v1843
    %v1845 = vadd.f32 %v1844, 1.0
    %v1846 = vrcp.pop %v1845
    %v1847 = vmul.f32 1.0, %v1846
    %v1848 = vtanh.pop %v1841
    %v1850 = vrot.slane %v1755, 6
    %v1852 = vmul.f32 %v1847, %v1850
    %1854 = vrot.lane.b32.xlu0 %v1848, 64
    %v1855 = vpop.permute.xlu0 %1854
    %v1857 = vmul.f32 %v1847, %v1855
    %1859 = vrot.lane.b32.xlu0 %v1857, 32
    %v1860 = vpop.permute.xlu0 %1859
    %v1862 = vadd.f32 %v1852, %v1860
    %v1863 = vtanh.pop %v1862
    %1865 = vrot.lane.b32.xlu0 %v1863, 64
    %v1866 = vpop.permute.xlu0 %1865
    %v1868 = vmul.f32 %v1847, %v1866
    %v1870 = vrot.slane %v1868, 6
    %1871 = vrot.lane.b32.xlu0 %v1870, 32
    %v1872 = vpop.permute.xlu0 %1871
    %v1873 = vsel %vm92, %v1872, 0
    %1875 = vmatprep.subr.mxu0 0.0
    %1876 = vmatpush1.msra.mxu0 %v74
    %1877 = vmatprep.subr.mxu0 0.0
    %1878 = vmatpush1.msra.mxu0 %v75
    %1879 = vmatprep.subr.mxu0 0.0
    %1880 = vmatpush1.msra.mxu0 %v76
    %1881 = vmatprep.subr.mxu0 0.0
    %1882 = vmatpush1.msra.mxu0 %v77
    %1883 = vmatprep.subr.mxu0 0.0
    %1884 = vmatpush1.msra.mxu0 0.0
    %1885 = vmatprep.subr.mxu0 0.0
    %1886 = vmatpush1.msra.mxu0 0.0
    %1887 = vmatprep.subr.mxu0 0.0
    %1888 = vmatpush1.msra.mxu0 0.0
    %1889 = vmatprep.subr.mxu0 0.0
    %1890 = vmatpush1.msra.mxu0 0.0
    %1891 = vmatprep.subr.mxu0 0.0
    %1892 = vmatpush1.msra.mxu0 0.0
    %1893 = vmatprep.subr.mxu0 0.0
    %1894 = vmatpush1.msra.mxu0 0.0
    %1895 = vmatprep.subr.mxu0 0.0
    %1896 = vmatpush1.msra.mxu0 0.0
    %1897 = vmatprep.subr.mxu0 0.0
    %1898 = vmatpush1.msra.mxu0 0.0
    %1899 = vmatprep.subr.mxu0 0.0
    %1900 = vmatpush1.msra.mxu0 0.0
    %1901 = vmatprep.subr.mxu0 0.0
    %1902 = vmatpush1.msra.mxu0 0.0
    %1903 = vmatprep.subr.mxu0 0.0
    %1904 = vmatpush1.msra.mxu0 0.0
    %1905 = vmatprep.subr.mxu0 0.0
    %1906 = vmatpush1.msra.mxu0 0.0
    %1907 = vmatprep.subr.mxu0 0.0
    %1908 = vmatpush1.msra.mxu0 0.0
    %1909 = vmatprep.subr.mxu0 0.0
    %1910 = vmatpush1.msra.mxu0 0.0
    %1911 = vmatprep.subr.mxu0 0.0
    %1912 = vmatpush1.msra.mxu0 0.0
    %1913 = vmatprep.subr.mxu0 0.0
    %1914 = vmatpush1.msra.mxu0 0.0
    %1915 = vmatprep.subr.mxu0 0.0
    %1916 = vmatpush1.msra.mxu0 0.0
    %1917 = vmatprep.subr.mxu0 0.0
    %1918 = vmatpush1.msra.mxu0 0.0
    %1919 = vmatprep.subr.mxu0 0.0
    %1920 = vmatpush1.msra.mxu0 0.0
    %1921 = vmatprep.subr.mxu0 0.0
    %1922 = vmatpush1.msra.mxu0 0.0
    %1923 = vmatprep.subr.mxu0 0.0
    %1924 = vmatpush1.msra.mxu0 0.0
    %1925 = vmatprep.subr.mxu0 0.0
    %1926 = vmatpush1.msra.mxu0 0.0
    %1927 = vmatprep.subr.mxu0 0.0
    %1928 = vmatpush1.msra.mxu0 0.0
    %1929 = vmatprep.subr.mxu0 0.0
    %1930 = vmatpush1.msra.mxu0 0.0
    %1931 = vmatprep.subr.mxu0 0.0
    %1932 = vmatpush1.msra.mxu0 0.0
    %1933 = vmatprep.subr.mxu0 0.0
    %1934 = vmatpush1.msra.mxu0 0.0
    %1935 = vmatprep.subr.mxu0 0.0
    %1936 = vmatpush1.msra.mxu0 0.0
    %1937 = vmatprep.subr.mxu0 0.0
    %1938 = vmatpush1.msra.mxu0 0.0
    %1939 = vmatprep.mubr.f32.mxu0 0.0
    %1940 = vmatmul.mubr.f32.gmra.mrb[0].mxu0 %v1873
    %v1941 = vpop.f32.mrb[0].mxu0
    %v1942 = vadd.f32 0.0, %v1941
    %v1943 = vpop.f32.mrb[0].mxu0
    %1944 = vdwg.mxu0
    %v1945 = vadd.f32 %v1448, %v1942
    %v1946 = vxor.u32 %v1945, 2147483648
    %v1947 = vmul.f32 %v1946, 1.442695
    %v1948 = vpow.pop %v1947
    %v1949 = vadd.f32 %v1948, 1.0
    %v1950 = vrcp.pop %v1949
    %v1951 = vmul.f32 1.0, %v1950
    %v1952 = vtanh.pop %v1945
    %v1954 = vrot.slane %v1862, 6
    %v1956 = vmul.f32 %v1951, %v1954
    %1958 = vrot.lane.b32.xlu0 %v1952, 64
    %v1959 = vpop.permute.xlu0 %1958
    %v1961 = vmul.f32 %v1951, %v1959
    %1963 = vrot.lane.b32.xlu0 %v1961, 32
    %v1964 = vpop.permute.xlu0 %1963
    %v1966 = vadd.f32 %v1956, %v1964
    %v1967 = vtanh.pop %v1966
    %1969 = vrot.lane.b32.xlu0 %v1967, 64
    %v1970 = vpop.permute.xlu0 %1969
    %v1972 = vmul.f32 %v1951, %v1970
    %1974 = vrot.lane.b32.xlu0 %v1972, 32
    %v1975 = vpop.permute.xlu0 %1974
    %v1976 = vsel %vm92, %v1975, 0
    %1978 = vmatprep.subr.mxu0 0.0
    %1979 = vmatpush1.msra.mxu0 %v74
    %1980 = vmatprep.subr.mxu0 0.0
    %1981 = vmatpush1.msra.mxu0 %v75
    %1982 = vmatprep.subr.mxu0 0.0
    %1983 = vmatpush1.msra.mxu0 %v76
    %1984 = vmatprep.subr.mxu0 0.0
    %1985 = vmatpush1.msra.mxu0 %v77
    %1986 = vmatprep.subr.mxu0 0.0
    %1987 = vmatpush1.msra.mxu0 0.0
    %1988 = vmatprep.subr.mxu0 0.0
    %1989 = vmatpush1.msra.mxu0 0.0
    %1990 = vmatprep.subr.mxu0 0.0
    %1991 = vmatpush1.msra.mxu0 0.0
    %1992 = vmatprep.subr.mxu0 0.0
    %1993 = vmatpush1.msra.mxu0 0.0
    %1994 = vmatprep.subr.mxu0 0.0
    %1995 = vmatpush1.msra.mxu0 0.0
    %1996 = vmatprep.subr.mxu0 0.0
    %1997 = vmatpush1.msra.mxu0 0.0
    %1998 = vmatprep.subr.mxu0 0.0
    %1999 = vmatpush1.msra.mxu0 0.0
    %2000 = vmatprep.subr.mxu0 0.0
    %2001 = vmatpush1.msra.mxu0 0.0
    %2002 = vmatprep.subr.mxu0 0.0
    %2003 = vmatpush1.msra.mxu0 0.0
    %2004 = vmatprep.subr.mxu0 0.0
    %2005 = vmatpush1.msra.mxu0 0.0
    %2006 = vmatprep.subr.mxu0 0.0
    %2007 = vmatpush1.msra.mxu0 0.0
    %2008 = vmatprep.subr.mxu0 0.0
    %2009 = vmatpush1.msra.mxu0 0.0
    %2010 = vmatprep.subr.mxu0 0.0
    %2011 = vmatpush1.msra.mxu0 0.0
    %2012 = vmatprep.subr.mxu0 0.0
    %2013 = vmatpush1.msra.mxu0 0.0
    %2014 = vmatprep.subr.mxu0 0.0
    %2015 = vmatpush1.msra.mxu0 0.0
    %2016 = vmatprep.subr.mxu0 0.0
    %2017 = vmatpush1.msra.mxu0 0.0
    %2018 = vmatprep.subr.mxu0 0.0
    %2019 = vmatpush1.msra.mxu0 0.0
    %2020 = vmatprep.subr.mxu0 0.0
    %2021 = vmatpush1.msra.mxu0 0.0
    %2022 = vmatprep.subr.mxu0 0.0
    %2023 = vmatpush1.msra.mxu0 0.0
    %2024 = vmatprep.subr.mxu0 0.0
    %2025 = vmatpush1.msra.mxu0 0.0
    %2026 = vmatprep.subr.mxu0 0.0
    %2027 = vmatpush1.msra.mxu0 0.0
    %2028 = vmatprep.subr.mxu0 0.0
    %2029 = vmatpush1.msra.mxu0 0.0
    %2030 = vmatprep.subr.mxu0 0.0
    %2031 = vmatpush1.msra.mxu0 0.0
    %2032 = vmatprep.subr.mxu0 0.0
    %2033 = vmatpush1.msra.mxu0 0.0
    %2034 = vmatprep.subr.mxu0 0.0
    %2035 = vmatpush1.msra.mxu0 0.0
    %2036 = vmatprep.subr.mxu0 0.0
    %2037 = vmatpush1.msra.mxu0 0.0
    %2038 = vmatprep.subr.mxu0 0.0
    %2039 = vmatpush1.msra.mxu0 0.0
    %2040 = vmatprep.subr.mxu0 0.0
    %2041 = vmatpush1.msra.mxu0 0.0
    %2042 = vmatprep.mubr.f32.mxu0 0.0
    %2043 = vmatmul.mubr.f32.gmra.mrb[0].mxu0 %v1976
    %v2044 = vpop.f32.mrb[0].mxu0
    %v2045 = vadd.f32 0.0, %v2044
    %v2046 = vpop.f32.mrb[0].mxu0
    %2047 = vdwg.mxu0
    %v2049 = vrot.slane %v2045, 6
    %v2051 = vadd.f32 %v1448, %v2049
    %v2052 = vxor.u32 %v2051, 2147483648
    %v2053 = vmul.f32 %v2052, 1.442695
    %v2054 = vpow.pop %v2053
    %v2055 = vadd.f32 %v2054, 1.0
    %v2056 = vrcp.pop %v2055
    %v2057 = vmul.f32 1.0, %v2056
    %v2058 = vtanh.pop %v2051
    %v2060 = vrot.slane %v1966, 6
    %v2062 = vmul.f32 %v2057, %v2060
    %2064 = vrot.lane.b32.xlu0 %v2058, 64
    %v2065 = vpop.permute.xlu0 %2064
    %v2067 = vmul.f32 %v2057, %v2065
    %2069 = vrot.lane.b32.xlu0 %v2067, 32
    %v2070 = vpop.permute.xlu0 %2069
    %v2072 = vadd.f32 %v2062, %v2070
    %v2073 = vtanh.pop %v2072
    %2075 = vrot.lane.b32.xlu0 %v2073, 64
    %v2076 = vpop.permute.xlu0 %2075
    %v2078 = vmul.f32 %v2057, %v2076
    %v2080 = vrot.slane %v2078, 2
    %2081 = vrot.lane.b32.xlu0 %v2080, 32
    %v2082 = vpop.permute.xlu0 %2081
    %v2083 = vsel %vm92, %v2082, 0
    %2085 = vmatprep.subr.mxu0 0.0
    %2086 = vmatpush1.msra.mxu0 %v74
    %2087 = vmatprep.subr.mxu0 0.0
    %2088 = vmatpush1.msra.mxu0 %v75
    %2089 = vmatprep.subr.mxu0 0.0
    %2090 = vmatpush1.msra.mxu0 %v76
    %2091 = vmatprep.subr.mxu0 0.0
    %2092 = vmatpush1.msra.mxu0 %v77
    %2093 = vmatprep.subr.mxu0 0.0
    %2094 = vmatpush1.msra.mxu0 0.0
    %2095 = vmatprep.subr.mxu0 0.0
    %2096 = vmatpush1.msra.mxu0 0.0
    %2097 = vmatprep.subr.mxu0 0.0
    %2098 = vmatpush1.msra.mxu0 0.0
    %2099 = vmatprep.subr.mxu0 0.0
    %2100 = vmatpush1.msra.mxu0 0.0
    %2101 = vmatprep.subr.mxu0 0.0
    %2102 = vmatpush1.msra.mxu0 0.0
    %2103 = vmatprep.subr.mxu0 0.0
    %2104 = vmatpush1.msra.mxu0 0.0
    %2105 = vmatprep.subr.mxu0 0.0
    %2106 = vmatpush1.msra.mxu0 0.0
    %2107 = vmatprep.subr.mxu0 0.0
    %2108 = vmatpush1.msra.mxu0 0.0
    %2109 = vmatprep.subr.mxu0 0.0
    %2110 = vmatpush1.msra.mxu0 0.0
    %2111 = vmatprep.subr.mxu0 0.0
    %2112 = vmatpush1.msra.mxu0 0.0
    %2113 = vmatprep.subr.mxu0 0.0
    %2114 = vmatpush1.msra.mxu0 0.0
    %2115 = vmatprep.subr.mxu0 0.0
    %2116 = vmatpush1.msra.mxu0 0.0
    %2117 = vmatprep.subr.mxu0 0.0
    %2118 = vmatpush1.msra.mxu0 0.0
    %2119 = vmatprep.subr.mxu0 0.0
    %2120 = vmatpush1.msra.mxu0 0.0
    %2121 = vmatprep.subr.mxu0 0.0
    %2122 = vmatpush1.msra.mxu0 0.0
    %2123 = vmatprep.subr.mxu0 0.0
    %2124 = vmatpush1.msra.mxu0 0.0
    %2125 = vmatprep.subr.mxu0 0.0
    %2126 = vmatpush1.msra.mxu0 0.0
    %2127 = vmatprep.subr.mxu0 0.0
    %2128 = vmatpush1.msra.mxu0 0.0
    %2129 = vmatprep.subr.mxu0 0.0
    %2130 = vmatpush1.msra.mxu0 0.0
    %2131 = vmatprep.subr.mxu0 0.0
    %2132 = vmatpush1.msra.mxu0 0.0
    %2133 = vmatprep.subr.mxu0 0.0
    %2134 = vmatpush1.msra.mxu0 0.0
    %2135 = vmatprep.subr.mxu0 0.0
    %2136 = vmatpush1.msra.mxu0 0.0
    %2137 = vmatprep.subr.mxu0 0.0
    %2138 = vmatpush1.msra.mxu0 0.0
    %2139 = vmatprep.subr.mxu0 0.0
    %2140 = vmatpush1.msra.mxu0 0.0
    %2141 = vmatprep.subr.mxu0 0.0
    %2142 = vmatpush1.msra.mxu0 0.0
    %2143 = vmatprep.subr.mxu0 0.0
    %2144 = vmatpush1.msra.mxu0 0.0
    %2145 = vmatprep.subr.mxu0 0.0
    %2146 = vmatpush1.msra.mxu0 0.0
    %2147 = vmatprep.subr.mxu0 0.0
    %2148 = vmatpush1.msra.mxu0 0.0
    %2149 = vmatprep.mubr.f32.mxu0 0.0
    %2150 = vmatmul.mubr.f32.gmra.mrb[0].mxu0 %v2083
    %v2151 = vpop.f32.mrb[0].mxu0
    %v2152 = vadd.f32 0.0, %v2151
    %v2153 = vpop.f32.mrb[0].mxu0
    %2154 = vdwg.mxu0
    %v2156 = vrot.slane %v2152, 4
    %v2158 = vadd.f32 %v1448, %v2156
    %v2159 = vxor.u32 %v2158, 2147483648
    %v2160 = vmul.f32 %v2159, 1.442695
    %v2161 = vpow.pop %v2160
    %v2162 = vadd.f32 %v2161, 1.0
    %v2163 = vrcp.pop %v2162
    %v2164 = vmul.f32 1.0, %v2163
    %v2165 = vtanh.pop %v2158
    %v2167 = vrot.slane %v2072, 6
    %v2169 = vmul.f32 %v2164, %v2167
    %2171 = vrot.lane.b32.xlu0 %v2165, 64
    %v2172 = vpop.permute.xlu0 %2171
    %v2174 = vmul.f32 %v2164, %v2172
    %2176 = vrot.lane.b32.xlu0 %v2174, 32
    %v2177 = vpop.permute.xlu0 %2176
    %v2179 = vadd.f32 %v2169, %v2177
    %v2180 = vtanh.pop %v2179
    %2182 = vrot.lane.b32.xlu0 %v2180, 64
    %v2183 = vpop.permute.xlu0 %2182
    %v2185 = vmul.f32 %v2164, %v2183
    %v2187 = vrot.slane %v2185, 4
    %2188 = vrot.lane.b32.xlu0 %v2187, 32
    %v2189 = vpop.permute.xlu0 %2188
    %v2190 = vsel %vm92, %v2189, 0
    %2192 = vmatprep.subr.mxu0 0.0
    %2193 = vmatpush1.msra.mxu0 %v74
    %2194 = vmatprep.subr.mxu0 0.0
    %2195 = vmatpush1.msra.mxu0 %v75
    %2196 = vmatprep.subr.mxu0 0.0
    %2197 = vmatpush1.msra.mxu0 %v76
    %2198 = vmatprep.subr.mxu0 0.0
    %2199 = vmatpush1.msra.mxu0 %v77
    %2200 = vmatprep.subr.mxu0 0.0
    %2201 = vmatpush1.msra.mxu0 0.0
    %2202 = vmatprep.subr.mxu0 0.0
    %2203 = vmatpush1.msra.mxu0 0.0
    %2204 = vmatprep.subr.mxu0 0.0
    %2205 = vmatpush1.msra.mxu0 0.0
    %2206 = vmatprep.subr.mxu0 0.0
    %2207 = vmatpush1.msra.mxu0 0.0
    %2208 = vmatprep.subr.mxu0 0.0
    %2209 = vmatpush1.msra.mxu0 0.0
    %2210 = vmatprep.subr.mxu0 0.0
    %2211 = vmatpush1.msra.mxu0 0.0
    %2212 = vmatprep.subr.mxu0 0.0
    %2213 = vmatpush1.msra.mxu0 0.0
    %2214 = vmatprep.subr.mxu0 0.0
    %2215 = vmatpush1.msra.mxu0 0.0
    %2216 = vmatprep.subr.mxu0 0.0
    %2217 = vmatpush1.msra.mxu0 0.0
    %2218 = vmatprep.subr.mxu0 0.0
    %2219 = vmatpush1.msra.mxu0 0.0
    %2220 = vmatprep.subr.mxu0 0.0
    %2221 = vmatpush1.msra.mxu0 0.0
    %2222 = vmatprep.subr.mxu0 0.0
    %2223 = vmatpush1.msra.mxu0 0.0
    %2224 = vmatprep.subr.mxu0 0.0
    %2225 = vmatpush1.msra.mxu0 0.0
    %2226 = vmatprep.subr.mxu0 0.0
    %2227 = vmatpush1.msra.mxu0 0.0
    %2228 = vmatprep.subr.mxu0 0.0
    %2229 = vmatpush1.msra.mxu0 0.0
    %2230 = vmatprep.subr.mxu0 0.0
    %2231 = vmatpush1.msra.mxu0 0.0
    %2232 = vmatprep.subr.mxu0 0.0
    %2233 = vmatpush1.msra.mxu0 0.0
    %2234 = vmatprep.subr.mxu0 0.0
    %2235 = vmatpush1.msra.mxu0 0.0
    %2236 = vmatprep.subr.mxu0 0.0
    %2237 = vmatpush1.msra.mxu0 0.0
    %2238 = vmatprep.subr.mxu0 0.0
    %2239 = vmatpush1.msra.mxu0 0.0
    %2240 = vmatprep.subr.mxu0 0.0
    %2241 = vmatpush1.msra.mxu0 0.0
    %2242 = vmatprep.subr.mxu0 0.0
    %2243 = vmatpush1.msra.mxu0 0.0
    %2244 = vmatprep.subr.mxu0 0.0
    %2245 = vmatpush1.msra.mxu0 0.0
    %2246 = vmatprep.subr.mxu0 0.0
    %2247 = vmatpush1.msra.mxu0 0.0
    %2248 = vmatprep.subr.mxu0 0.0
    %2249 = vmatpush1.msra.mxu0 0.0
    %2250 = vmatprep.subr.mxu0 0.0
    %2251 = vmatpush1.msra.mxu0 0.0
    %2252 = vmatprep.subr.mxu0 0.0
    %2253 = vmatpush1.msra.mxu0 0.0
    %2254 = vmatprep.subr.mxu0 0.0
    %2255 = vmatpush1.msra.mxu0 0.0
    %2256 = vmatprep.mubr.f32.mxu0 0.0
    %2257 = vmatmul.mubr.f32.gmra.mrb[0].mxu0 %v2190
    %v2258 = vpop.f32.mrb[0].mxu0
    %v2259 = vadd.f32 0.0, %v2258
    %v2260 = vpop.f32.mrb[0].mxu0
    %2261 = vdwg.mxu0
    %v2263 = vrot.slane %v2259, 2
    %v2265 = vadd.f32 %v1448, %v2263
    %v2266 = vxor.u32 %v2265, 2147483648
    %v2267 = vmul.f32 %v2266, 1.442695
    %v2268 = vpow.pop %v2267
    %v2269 = vadd.f32 %v2268, 1.0
    %v2270 = vrcp.pop %v2269
    %v2271 = vmul.f32 1.0, %v2270
    %v2272 = vtanh.pop %v2265
    %v2274 = vrot.slane %v2179, 6
    %v2276 = vmul.f32 %v2271, %v2274
    %2278 = vrot.lane.b32.xlu0 %v2272, 64
    %v2279 = vpop.permute.xlu0 %2278
    %v2281 = vmul.f32 %v2271, %v2279
    %2283 = vrot.lane.b32.xlu0 %v2281, 32
    %v2284 = vpop.permute.xlu0 %2283
    %v2286 = vadd.f32 %v2276, %v2284
    %v2287 = vtanh.pop %v2286
    %2289 = vrot.lane.b32.xlu0 %v2287, 64
    %v2290 = vpop.permute.xlu0 %2289
    %v2292 = vmul.f32 %v2271, %v2290
    %v2293 = vxor.u32 %v1450, 2147483648
    %v2294 = vmul.f32 %v2293, 1.442695
    %v2295 = vpow.pop %v2294
    %v2296 = vadd.f32 %v2295, 1.0
    %v2297 = vrcp.pop %v2296
    %v2298 = vmul.f32 1.0, %v2297
    %v2299 = vtanh.pop %v1450
    %v2300 = vmul.f32 %v2298, 0.0
    %2302 = vrot.lane.b32.xlu0 %v2299, 64
    %v2303 = vpop.permute.xlu0 %2302
    %v2305 = vmul.f32 %v2298, %v2303
    %2307 = vrot.lane.b32.xlu0 %v2305, 32
    %v2308 = vpop.permute.xlu0 %2307
    %v2310 = vadd.f32 %v2300, %v2308
    %v2311 = vtanh.pop %v2310
    %2313 = vrot.lane.b32.xlu0 %v2311, 64
    %v2314 = vpop.permute.xlu0 %2313
    %v2316 = vmul.f32 %v2298, %v2314
    %2318 = vrot.lane.b32.xlu0 %v2292, 32
    %v2319 = vpop.permute.xlu0 %2318
    %2322 = vrot.lane.b32.xlu0 %v2316, 64
    %v2323 = vpop.permute.xlu0 %2322
    %v2325 = vsel %vm92, %v2319, %v2323
    %v2326 = vld [vmem:[%s7] sm:$0xff]
    %v2327 = vld [vmem:[%s7 + $0x8] sm:$0xff]
    %v2328 = vld [vmem:[%s7 + $0x10] sm:$0xff]
    %v2329 = vld [vmem:[%s7 + $0x18] sm:$0xff]
    %v2330 = vld [vmem:[%s7 + $0x20] sm:$0xff]
    %v2331 = vld [vmem:[%s7 + $0x28] sm:$0xff]
    %v2332 = vld [vmem:[%s7 + $0x30] sm:$0xff]
    %v2333 = vld [vmem:[%s7 + $0x38] sm:$0xff]
    %v2334 = vld [vmem:[%s8] sm:$0x1]
    %v2336 = vlaneseq
    %v2337 = vshrl.u32 %v2336, 7
    %v2338 = vsub.s32 0, %v2337
    %v2339 = vrot.slane %v2334, %v2338
    %v2342 = vrot.slane %v2325, 6
    %v2343 = vsel %vm179, %v2342, 0
    %2345 = vmatprep.subr.mxu0 0.0
    %2346 = vmatpush1.msra.mxu0 %v2326
    %2347 = vmatprep.subr.mxu0 0.0
    %2348 = vmatpush1.msra.mxu0 %v2327
    %2349 = vmatprep.subr.mxu0 0.0
    %2350 = vmatpush1.msra.mxu0 %v2328
    %2351 = vmatprep.subr.mxu0 0.0
    %2352 = vmatpush1.msra.mxu0 %v2329
    %2353 = vmatprep.subr.mxu0 0.0
    %2354 = vmatpush1.msra.mxu0 %v2330
    %2355 = vmatprep.subr.mxu0 0.0
    %2356 = vmatpush1.msra.mxu0 %v2331
    %2357 = vmatprep.subr.mxu0 0.0
    %2358 = vmatpush1.msra.mxu0 %v2332
    %2359 = vmatprep.subr.mxu0 0.0
    %2360 = vmatpush1.msra.mxu0 %v2333
    %2361 = vmatprep.subr.mxu0 0.0
    %2362 = vmatpush1.msra.mxu0 0.0
    %2363 = vmatprep.subr.mxu0 0.0
    %2364 = vmatpush1.msra.mxu0 0.0
    %2365 = vmatprep.subr.mxu0 0.0
    %2366 = vmatpush1.msra.mxu0 0.0
    %2367 = vmatprep.subr.mxu0 0.0
    %2368 = vmatpush1.msra.mxu0 0.0
    %2369 = vmatprep.subr.mxu0 0.0
    %2370 = vmatpush1.msra.mxu0 0.0
    %2371 = vmatprep.subr.mxu0 0.0
    %2372 = vmatpush1.msra.mxu0 0.0
    %2373 = vmatprep.subr.mxu0 0.0
    %2374 = vmatpush1.msra.mxu0 0.0
    %2375 = vmatprep.subr.mxu0 0.0
    %2376 = vmatpush1.msra.mxu0 0.0
    %2377 = vmatprep.subr.mxu0 0.0
    %2378 = vmatpush1.msra.mxu0 0.0
    %2379 = vmatprep.subr.mxu0 0.0
    %2380 = vmatpush1.msra.mxu0 0.0
    %2381 = vmatprep.subr.mxu0 0.0
    %2382 = vmatpush1.msra.mxu0 0.0
    %2383 = vmatprep.subr.mxu0 0.0
    %2384 = vmatpush1.msra.mxu0 0.0
    %2385 = vmatprep.subr.mxu0 0.0
    %2386 = vmatpush1.msra.mxu0 0.0
    %2387 = vmatprep.subr.mxu0 0.0
    %2388 = vmatpush1.msra.mxu0 0.0
    %2389 = vmatprep.subr.mxu0 0.0
    %2390 = vmatpush1.msra.mxu0 0.0
    %2391 = vmatprep.subr.mxu0 0.0
    %2392 = vmatpush1.msra.mxu0 0.0
    %2393 = vmatprep.subr.mxu0 0.0
    %2394 = vmatpush1.msra.mxu0 0.0
    %2395 = vmatprep.subr.mxu0 0.0
    %2396 = vmatpush1.msra.mxu0 0.0
    %2397 = vmatprep.subr.mxu0 0.0
    %2398 = vmatpush1.msra.mxu0 0.0
    %2399 = vmatprep.subr.mxu0 0.0
    %2400 = vmatpush1.msra.mxu0 0.0
    %2401 = vmatprep.subr.mxu0 0.0
    %2402 = vmatpush1.msra.mxu0 0.0
    %2403 = vmatprep.subr.mxu0 0.0
    %2404 = vmatpush1.msra.mxu0 0.0
    %2405 = vmatprep.subr.mxu0 0.0
    %2406 = vmatpush1.msra.mxu0 0.0
    %2407 = vmatprep.subr.mxu0 0.0
    %2408 = vmatpush1.msra.mxu0 0.0
    %2409 = vmatprep.mubr.f32.mxu0 0.0
    %2410 = vmatmul.mubr.f32.gmra.mrb[0].mxu0 %v2343
    %v2411 = vpop.f32.mrb[0].mxu0
    %v2412 = vadd.f32 %v2339, %v2411
    %v2413 = vpop.f32.mrb[0].mxu0
    %2414 = vdwg.mxu0
    %vm2415 = vcmask 9216
    %v2416 = vsel %vm2415, %v2412, -inf
    %2417 = vmax.xlane.f32.xlu0 %v2416
    %v2418 = vpop.xlane.xlu0 %2417
    %v2419 = vsub.f32 %v2412, %v2418
    %v2420 = vmul.f32 %v2419, 1.442695
    %v2421 = vpow.pop %v2420
    %v2422 = vsel %vm2415, %v2421, 0.0
    %2423 = vadd.xlane.f32.xlu0 %v2422
    %v2424 = vpop.xlane.xlu0 %2423
    %v2425 = vrcp.pop %v2424
    %v2426 = vmul.f32 %v2421, %v2425
    %2427 = vst.msk [vmem:[#allocation3] sm:$0x3] %vm2415, %v2426
    // Predicated region
    $region38: #{bilstm_forward.1} parent=1 // pred_check
      _
    $region39: #{bilstm_forward.1} parent=1 // pred_check_branch
      %2429 = sbr.rel (0) target = $region41
    $region40: #{bilstm_forward.1} parent=1 // pred_region
      %s2431 = ssub.s32 32, 32
      %2432 = vsyncadd [#allocation4], %s2431
      %s2434 = sshll.u32 [#allocation3], 4
      %s2435 = int_to_ptr.vmem [resolvable:$true] %s2434
      %2437 = dma.vmem_to_hbm [thread:$0]  %s2435, 32, %s9, [#allocation4]
    $region41: #{bilstm_forward.1} parent=1 // pred_fallthru
      _
    // Predicated region
    $region42: #{bilstm_forward.1} parent=1 // pred_check
      _
    $region43: #{bilstm_forward.1} parent=1 // pred_check_branch
      %2439 = sbr.rel (0) target = $region45
    $region44: #{bilstm_forward.1} parent=1 // pred_region
      %2440 = dma.done [#allocation4], 32
    $region45: #{bilstm_forward.1} parent=1 // pred_fallthru
      _
    %2441 = vsyncpa [#allocation4], 1

</llo_original>
